<compile_context>
chip_gen: v5e
topology: v5e:2x2
jax: 0.10.0
libtpu: 0.0.40
codegen_flags: <defaults>
</compile_context>

<pallas_src>
import jax
import jax.numpy as jnp
from jax import lax
from jax.experimental import pallas as pl
from jax.experimental.pallas import tpu as pltpu

_EPS = 1e-5


# --------------------------------------------------------------------------
# helpers
# --------------------------------------------------------------------------
def _round_up(x, m):
    return ((x + m - 1) // m) * m


def _pick_batch_tile(batch):
    """Largest VMEM-friendly batch tile; >=2 grid steps when the batch allows
    so the "parallel" axis spans both v7x TensorCores."""
    if batch <= 8:
        return 8
    half = _round_up((batch + 1) // 2, 8)
    return min(512, half)


def _vmem_limit_bytes():
    """Generation-aware scoped-VMEM ceiling (~half of physical VMEM):
    32 MiB on v7x (64 MiB physical), 64 MiB on v5e/v6e (128 MiB physical)."""
    try:
        cap = pltpu.get_tpu_info().vmem_capacity_bytes
    except Exception:  # info query unavailable -> conservative default
        cap = 64 * 1024 * 1024
    return int(max(32 * 1024 * 1024, cap // 2))


# --------------------------------------------------------------------------
# main fused kernel:  bn_in-normalize -> block-diagonal ComplexLinear ->
#                     amp2 gate -> final ComplexLinear (N=2, VPU reduction)
# --------------------------------------------------------------------------
def _linear_main_kernel(x_ref, scale_ref, shift_ref, parity_ref, w_in_ref,
                        w_fc_t_ref, y_ref):
    # x_ref: (TB, F) f32 tile of the flattened input (column j = l*2C + 2c + p).
    # bn_in normalization folded into per-column scale/shift (f32, VPU).
    xn = x_ref[...] * scale_ref[...] + shift_ref[...]                  # (TB, F)

    # Fused per-channel ComplexLinear: one block-diagonal complex-as-real
    # matmul.  bf16 operands, f32 accumulation (MXU-native on v5e/v6e/v7x).
    # TODO(synk): on v7x, fp8 weights would halve resident VMEM / raise MXU
    # throughput if the model tolerates the precision loss.
    z = jnp.dot(xn.astype(jnp.bfloat16), w_in_ref[...],
                preferred_element_type=jnp.float32)                    # (TB, F)

    # amp2 gate in f32: for column j (j = l*2C + 2c + p) the gate is
    # xn[j_even]^2 + xn[j_even+1]^2 at the same l, i.e. a sum over adjacent
    # lane pairs.  Even/odd lane swizzle via pltpu.roll (XLU slot, exact,
    # lane-dense); the lane-parity mask is a resident input (no per-step iota).
    xn2 = xn * xn
    n_col = xn2.shape[-1]
    nbr_right = pltpu.roll(xn2, shift=n_col - 1, axis=1)   # [j] -> xn2[j + 1]
    nbr_left = pltpu.roll(xn2, shift=1, axis=1)            # [j] -> xn2[j - 1]
    m = parity_ref[...]                                    # 1.0 on even lanes
    gate = xn2 + m * nbr_right + (1.0 - m) * nbr_left                  # (TB, F)

    # Final ComplexLinear with only output_size(=2) columns: VPU multiply +
    # lane reduction per column, full f32 (no wasteful N=2 MXU pass, and the
    # delicate bn_out input stays full precision).
    gz = gate * z
    out_n = y_ref.shape[-1]
    cols = [jnp.sum(gz * w_fc_t_ref[o:o + 1, :], axis=-1, keepdims=True)
            for o in range(out_n)]
    y_ref[...] = jnp.concatenate(cols, axis=-1)


def _main_forward_call(x2d, scale_col, shift_col, parity, w_in, w_fc_t, *,
                       tb, out_n, single_buffer_consts):
    bp, feat = x2d.shape
    grid = (bp // tb,)

    if single_buffer_consts:
        # Grid-invariant operands: index_map is constant, no need to double
        # buffer them -> freed VMEM goes to bigger batch tiles as F grows.
        def const_spec(shape):
            return pl.BlockSpec(shape, lambda i: (0, 0),
                                pipeline_mode=pl.Buffered(1))
    else:
        def const_spec(shape):
            return pl.BlockSpec(shape, lambda i: (0, 0))

    return pl.pallas_call(
        _linear_main_kernel,
        out_shape=jax.ShapeDtypeStruct((bp, out_n), jnp.float32),
        grid=grid,
        in_specs=[
            pl.BlockSpec((tb, feat), lambda i: (i, 0)),   # streamed x tile
            const_spec((1, feat)),                        # bn_in scale
            const_spec((1, feat)),                        # bn_in shift
            const_spec((1, feat)),                        # lane parity mask
            const_spec((feat, feat)),                     # fused W_in (bf16)
            const_spec((out_n, feat)),                    # fused W_fc^T (f32)
        ],
        out_specs=pl.BlockSpec((tb, out_n), lambda i: (i, 0)),
        compiler_params=pltpu.CompilerParams(
            dimension_semantics=("parallel",),
            vmem_limit_bytes=_vmem_limit_bytes()),
    )(x2d, scale_col, shift_col, parity, w_in, w_fc_t)


# --------------------------------------------------------------------------
# wrapper (forward pass)
# --------------------------------------------------------------------------
def linear_forward(x, h_0, fused, *, n_channels, input_size, output_size,
                   eps=_EPS):
    """x: (B, input_size, 2*n_channels) float32.  h_0 is unused (as in ref)."""
    del h_0  # TODO(synk): h_0 is accepted but never used by the reference forward.
    B = x.shape[0]
    C, L = n_channels, input_size
    F = 2 * C * L
    assert x.shape == (B, L, 2 * C)
    assert output_size == 2, "reference bn_out=BatchNorm1d(2) requires output_size==2"

    x = x.astype(jnp.float32)

    # ---- bn_in batch statistics (training mode, biased variance) ----------
    # Single pass over x (sum + sum-of-squares) folded into per-COLUMN
    # scale/shift vectors matching the (l, ch) flattening order.
    n = jnp.float32(B * L)
    s1 = jnp.sum(x, axis=(0, 1))                                       # (2C,)
    s2 = jnp.sum(jnp.square(x), axis=(0, 1))                           # (2C,)
    mean = s1 / n
    var = jnp.maximum(s2 / n - jnp.square(mean), 0.0)  # guard cancellation
    scale_ch = fused["bn_in_gamma"] * lax.rsqrt(var + eps)             # (2C,)
    shift_ch = fused["bn_in_beta"] - mean * scale_ch                   # (2C,)
    scale_col = jnp.tile(scale_ch, L).reshape(1, F)
    shift_col = jnp.tile(shift_ch, L).reshape(1, F)

    # Lane-parity mask (1.0 on even = real columns); resident inside the kernel.
    parity = (jnp.arange(F, dtype=jnp.int32) % 2 == 0)
    parity = parity.astype(jnp.float32).reshape(1, F)

    # Natural layout, no transpose: contiguous reshape (B, L, 2C) -> (B, 2CL).
    x2d = x.reshape(B, F)

    # ---- batch tiling: big tiles, >=2 parallel steps, pad ragged batches ---
    tb = _pick_batch_tile(B)
    b_pad = _round_up(B, tb)
    if b_pad != B:
        # Padded rows see xn == shift (finite) and only feed output rows that
        # are sliced off below; bn_in stats above already used the true batch.
        x2d = jnp.pad(x2d, ((0, b_pad - B), (0, 0)))

    args = (x2d, scale_col, shift_col, parity,
            fused["w_in_fused"], fused["w_fc_fused_t"])
    try:
        y_pre = _main_forward_call(*args, tb=tb, out_n=output_size,
                                   single_buffer_consts=True)
    except Exception:
        # TODO(synk): drop this fallback once pl.Buffered(1) single-buffering of
        # grid-invariant operands is guaranteed on the deployed jax version.
        y_pre = _main_forward_call(*args, tb=tb, out_n=output_size,
                                   single_buffer_consts=False)
    y_pre = y_pre[:B]

    # ---- bn_out (training mode) on the tiny (B, 2) result ------------------
    # Plain jnp/XLA per perf review: a dedicated kernel launch for a (B, 2)
    # batch-norm is pure fixed overhead.
    mu = jnp.mean(y_pre, axis=0, keepdims=True)
    v = jnp.mean(jnp.square(y_pre - mu), axis=0, keepdims=True)  # biased var
    yn = (y_pre - mu) * lax.rsqrt(v + eps)
    return yn * fused["bn_out_gamma"][None, :] + fused["bn_out_beta"][None, :]


# --------------------------------------------------------------------------
# parameters
# --------------------------------------------------------------------------
def init_params(key, n_channels, input_size, output_size):
    """Parameters mirroring the torch module (weights stored as (in, out))."""
    C, L = n_channels, input_size
    out_half = output_size // 2
    in_total = C * L
    k1, k2, k3, k4 = jax.random.split(key, 4)

    # PyTorch nn.Linear default init: U(-1/sqrt(in), 1/sqrt(in)).
    bound_in = 1.0 / jnp.sqrt(jnp.float32(L))
    bound_fc = 1.0 / jnp.sqrt(jnp.float32(in_total))

    return {
        "w_in_real": jax.random.uniform(k1, (C, L, L), jnp.float32,
                                        -bound_in, bound_in),
        "w_in_imag": jax.random.uniform(k2, (C, L, L), jnp.float32,
                                        -bound_in, bound_in),
        "w_fc_real": jax.random.uniform(k3, (in_total, out_half), jnp.float32,
                                        -bound_fc, bound_fc),
        "w_fc_imag": jax.random.uniform(k4, (in_total, out_half), jnp.float32,
                                        -bound_fc, bound_fc),
        # BatchNorm affine params at PyTorch defaults (gamma=1, beta=0).
        "bn_in_gamma": jnp.ones((2 * C,), jnp.float32),
        "bn_in_beta": jnp.zeros((2 * C,), jnp.float32),
        "bn_out_gamma": jnp.ones((2,), jnp.float32),
        "bn_out_beta": jnp.zeros((2,), jnp.float32),
    }


def fuse_params(params, *, n_channels, input_size, output_size):
    """One-time static rearrangement of weights into the fused kernel layout.

    Row/column ordering of both fused weights is (l, channel, real/imag), i.e.
    index = l*2C + 2c + p, which matches x.reshape(B, L*2C) directly.

    TODO(synk): if C or L grows, switch to channel-major flattening with a
    per-channel (2L, 2L) batched matmul so zero blocks never reach the MXU
    (the interleaved block-diagonal W_in is only 1/C dense) — most important
    on v5e and for fitting large models in v7x's 64 MiB VMEM.
    """
    C, L = n_channels, input_size
    oh = output_size // 2

    # Block-diagonal complex-as-real weight for the per-channel stage.
    Wr, Wi = params["w_in_real"], params["w_in_imag"]        # (C, L_in, L_out)
    row0 = jnp.stack([Wr, Wi], axis=-1)                      # p=0: [Wr | Wi]
    row1 = jnp.stack([-Wi, Wr], axis=-1)                     # p=1: [-Wi | Wr]
    blk = jnp.stack([row0, row1], axis=-2)                   # (C, Li, Lo, p, q)
    w_in = jnp.einsum("clmpq,cd->lcpmdq", blk, jnp.eye(C, dtype=blk.dtype))
    w_in = w_in.reshape(2 * C * L, 2 * C * L)

    # Fused final complex weight (rows in the same (l, c, p) order; columns
    # are [C_real | C_imag]); stored transposed for the in-kernel VPU reduction.
    WrF = params["w_fc_real"].reshape(C, L, oh)
    WiF = params["w_fc_imag"].reshape(C, L, oh)
    p0 = jnp.stack([WrF, WiF], axis=-2)                      # q=0 rows
    p1 = jnp.stack([-WiF, WrF], axis=-2)                     # q=1 rows
    blk2 = jnp.stack([p0, p1], axis=2)                       # (C, L, q, half, oh)
    w_fc = jnp.transpose(blk2, (1, 0, 2, 3, 4)).reshape(2 * C * L, 2 * oh)

    return {
        "w_in_fused": w_in.astype(jnp.bfloat16),     # bf16 MXU operand
        "w_fc_fused_t": w_fc.T.astype(jnp.float32),  # (output_size, 2CL), f32
        "bn_in_gamma": params["bn_in_gamma"],
        "bn_in_beta": params["bn_in_beta"],
        "bn_out_gamma": params["bn_out_gamma"],
        "bn_out_beta": params["bn_out_beta"],
    }


# --------------------------------------------------------------------------
# pure-JAX reference of the torch forward (f32), for validation
# --------------------------------------------------------------------------
def _reference_forward(x, params, *, n_channels, input_size, output_size,
                       eps=_EPS):
    del input_size, output_size
    C = n_channels
    mean = jnp.mean(x, axis=(0, 1))
    var = jnp.mean(jnp.square(x - mean), axis=(0, 1))
    xn = (x - mean) * lax.rsqrt(var + eps)
    xn = xn * params["bn_in_gamma"] + params["bn_in_beta"]
    xi_parts, xq_parts = [], []
    for c in range(C):
        x_i = xn[..., 2 * c]
        x_q = xn[..., 2 * c + 1]
        wr = params["w_in_real"][c]
        wi = params["w_in_imag"][c]
        c_real = x_i @ wr - x_q @ wi
        c_imag = x_q @ wr + x_i @ wi
        amp2 = x_i ** 2 + x_q ** 2
        xi_parts.append(amp2 * c_real)
        xq_parts.append(amp2 * c_imag)
    x_ii = jnp.concatenate(xi_parts, axis=-1)
    x_qq = jnp.concatenate(xq_parts, axis=-1)
    wr, wi = params["w_fc_real"], params["w_fc_imag"]
    y = jnp.concatenate([x_ii @ wr - x_qq @ wi, x_qq @ wr + x_ii @ wi], axis=-1)
    mu = jnp.mean(y, axis=0)
    v = jnp.mean(jnp.square(y - mu), axis=0)
    return (y - mu) * lax.rsqrt(v + eps) * params["bn_out_gamma"] \
        + params["bn_out_beta"]


# --------------------------------------------------------------------------
if __name__ == "__main__":
    n_channels = 4
    input_size = 32
    output_size = 2    # bn_out = BatchNorm1d(2) forces this in the reference
    batch_size = 36    # ragged: exercises batch padding + a 2-step parallel grid

    key = jax.random.PRNGKey(0)
    kx, kh, kp = jax.random.split(key, 3)

    x = jax.random.normal(
        kx, (batch_size, input_size, 2 * n_channels), jnp.float32)
    h_0 = jax.random.normal(kh, (batch_size, input_size), jnp.float32)  # unused
    params = init_params(kp, n_channels, input_size, output_size)
    fused = fuse_params(params, n_channels=n_channels,
                        input_size=input_size, output_size=output_size)

    out = linear_forward(
        x, h_0, fused,
        n_channels=n_channels, input_size=input_size, output_size=output_size)
    out = jax.block_until_ready(out)

    assert out.shape == (batch_size, output_size)
    assert bool(jnp.all(jnp.isfinite(out)))

    # Loose-tolerance check vs a pure-f32 JAX reference of the torch forward
    # (the kernel's big matmul runs in bf16, so exact equality is not expected).
    ref = _reference_forward(x, params, n_channels=n_channels,
                             input_size=input_size, output_size=output_size)
    max_err = float(jnp.max(jnp.abs(out - ref)))
    assert max_err < 0.15, f"kernel deviates from reference: max abs err {max_err}"

    print("KERNEL_OK")
</pallas_src>

<mosaic_0001>
module attributes {stable_mosaic.version = 11 : i64} {
  func.func @_linear_main_kernel(%arg0: i32, %arg1: memref<24x256xf32, #tpu.memory_space<vmem>>, %arg2: memref<1x256xf32, #tpu.memory_space<vmem>>, %arg3: memref<1x256xf32, #tpu.memory_space<vmem>>, %arg4: memref<1x256xf32, #tpu.memory_space<vmem>>, %arg5: memref<256x256xbf16, #tpu.memory_space<vmem>>, %arg6: memref<2x256xf32, #tpu.memory_space<vmem>>, %arg7: memref<24x2xf32, #tpu.memory_space<vmem>>) attributes {dimension_semantics = [#tpu.dimension_semantics<parallel>], iteration_bounds = array<i64: 2>, scalar_prefetch = 0 : i64, scratch_operands = 0 : i64, tpu.core_type = #tpu.core_type<tc>, window_params = [{transform_indices = @transform_0, window_bounds = array<i64: 24, 256>}, {pipeline_mode = #tpu.pipeline_mode<synchronous>, transform_indices = @transform_1, window_bounds = array<i64: 1, 256>}, {pipeline_mode = #tpu.pipeline_mode<synchronous>, transform_indices = @transform_2, window_bounds = array<i64: 1, 256>}, {pipeline_mode = #tpu.pipeline_mode<synchronous>, transform_indices = @transform_3, window_bounds = array<i64: 1, 256>}, {pipeline_mode = #tpu.pipeline_mode<synchronous>, transform_indices = @transform_4, window_bounds = array<i64: 256, 256>}, {pipeline_mode = #tpu.pipeline_mode<synchronous>, transform_indices = @transform_5, window_bounds = array<i64: 2, 256>}, {transform_indices = @transform_6, window_bounds = array<i64: 24, 2>}]} {
    %c0 = arith.constant 0 : index
    %c0_0 = arith.constant 0 : index
    %0 = vector.load %arg1[%c0, %c0_0] : memref<24x256xf32, #tpu.memory_space<vmem>>, vector<24x256xf32>
    %c0_1 = arith.constant 0 : index
    %c0_2 = arith.constant 0 : index
    %1 = vector.load %arg2[%c0_1, %c0_2] : memref<1x256xf32, #tpu.memory_space<vmem>>, vector<1x256xf32>
    %2 = vector.broadcast %1 : vector<1x256xf32> to vector<24x256xf32>
    %3 = arith.mulf %0, %2 : vector<24x256xf32>
    %c0_3 = arith.constant 0 : index
    %c0_4 = arith.constant 0 : index
    %4 = vector.load %arg3[%c0_3, %c0_4] : memref<1x256xf32, #tpu.memory_space<vmem>>, vector<1x256xf32>
    %5 = vector.broadcast %4 : vector<1x256xf32> to vector<24x256xf32>
    %6 = arith.addf %3, %5 : vector<24x256xf32>
    %7 = arith.truncf %6 : vector<24x256xf32> to vector<24x256xbf16>
    %c0_5 = arith.constant 0 : index
    %c0_6 = arith.constant 0 : index
    %8 = vector.load %arg5[%c0_5, %c0_6] : memref<256x256xbf16, #tpu.memory_space<vmem>>, vector<256x256xbf16>
    %cst = arith.constant dense<0.000000e+00> : vector<24x256xf32>
    %9 = tpu.matmul %7, %8, %cst {dimension_numbers = #tpu.dot_dimension_numbers<[1], [0], [0], [1], [0, 0, 1, 1], [], []>} : vector<24x256xbf16>, vector<256x256xbf16>, vector<24x256xf32> -> vector<24x256xf32>
    %10 = arith.mulf %6, %6 : vector<24x256xf32>
    %c255_i32 = arith.constant 255 : i32
    %11 = tpu.dynamic_rotate %10 by %c255_i32 dim 1 : vector<24x256xf32>, i32 -> vector<24x256xf32>
    %c1_i32 = arith.constant 1 : i32
    %12 = tpu.dynamic_rotate %10 by %c1_i32 dim 1 : vector<24x256xf32>, i32 -> vector<24x256xf32>
    %c0_7 = arith.constant 0 : index
    %c0_8 = arith.constant 0 : index
    %13 = vector.load %arg4[%c0_7, %c0_8] : memref<1x256xf32, #tpu.memory_space<vmem>>, vector<1x256xf32>
    %14 = vector.broadcast %13 : vector<1x256xf32> to vector<24x256xf32>
    %15 = arith.mulf %14, %11 : vector<24x256xf32>
    %16 = arith.addf %10, %15 : vector<24x256xf32>
    %cst_9 = arith.constant 1.000000e+00 : f32
    %17 = vector.broadcast %cst_9 : f32 to vector<1x256xf32>
    %18 = arith.subf %17, %13 : vector<1x256xf32>
    %19 = vector.broadcast %18 : vector<1x256xf32> to vector<24x256xf32>
    %20 = arith.mulf %19, %12 : vector<24x256xf32>
    %21 = arith.addf %16, %20 : vector<24x256xf32>
    %22 = arith.mulf %21, %9 : vector<24x256xf32>
    %c0_10 = arith.constant 0 : index
    %c0_11 = arith.constant 0 : index
    %23 = vector.load %arg6[%c0_10, %c0_11] : memref<2x256xf32, #tpu.memory_space<vmem>>, vector<1x256xf32>
    %24 = vector.broadcast %23 : vector<1x256xf32> to vector<24x256xf32>
    %25 = arith.mulf %22, %24 : vector<24x256xf32>
    %cst_12 = arith.constant dense<0.000000e+00> : vector<24xf32>
    %26 = vector.multi_reduction <add>, %25, %cst_12 [1] : vector<24x256xf32> to vector<24xf32>
    %27 = vector.shape_cast %26 : vector<24xf32> to vector<24x1xf32>
    %c1 = arith.constant 1 : index
    %c0_13 = arith.constant 0 : index
    %28 = vector.load %arg6[%c1, %c0_13] : memref<2x256xf32, #tpu.memory_space<vmem>>, vector<1x256xf32>
    %29 = vector.broadcast %28 : vector<1x256xf32> to vector<24x256xf32>
    %30 = arith.mulf %22, %29 : vector<24x256xf32>
    %cst_14 = arith.constant dense<0.000000e+00> : vector<24xf32>
    %31 = vector.multi_reduction <add>, %30, %cst_14 [1] : vector<24x256xf32> to vector<24xf32>
    %32 = vector.shape_cast %31 : vector<24xf32> to vector<24x1xf32>
    %33 = tpu.concatenate %27, %32 in 1 : vector<24x1xf32>, vector<24x1xf32> -> vector<24x2xf32>
    %c0_15 = arith.constant 0 : index
    %c0_16 = arith.constant 0 : index
    %34 = vector.load %arg7[%c0_15, %c0_16] : memref<24x2xf32, #tpu.memory_space<vmem>>, vector<24x2xf32>
    tpu.vector_store %arg7[%c0_15, %c0_16], %33 {strides = array<i32>} : memref<24x2xf32, #tpu.memory_space<vmem>>, vector<24x2xf32>,
    return
  }
  func.func @transform_0(%arg0: i32) -> (i32, i32) {
    %c0_i32 = arith.constant 0 : i32
    %c0_i32_0 = arith.constant 0 : i32
    return %arg0, %c0_i32 : i32, i32
  }
  func.func @transform_1(%arg0: i32) -> (i32, i32) {
    %c0_i32 = arith.constant 0 : i32
    %c0_i32_0 = arith.constant 0 : i32
    %c0_i32_1 = arith.constant 0 : i32
    return %c0_i32, %c0_i32_0 : i32, i32
  }
  func.func @transform_2(%arg0: i32) -> (i32, i32) {
    %c0_i32 = arith.constant 0 : i32
    %c0_i32_0 = arith.constant 0 : i32
    %c0_i32_1 = arith.constant 0 : i32
    return %c0_i32, %c0_i32_0 : i32, i32
  }
  func.func @transform_3(%arg0: i32) -> (i32, i32) {
    %c0_i32 = arith.constant 0 : i32
    %c0_i32_0 = arith.constant 0 : i32
    %c0_i32_1 = arith.constant 0 : i32
    return %c0_i32, %c0_i32_0 : i32, i32
  }
  func.func @transform_4(%arg0: i32) -> (i32, i32) {
    %c0_i32 = arith.constant 0 : i32
    %c0_i32_0 = arith.constant 0 : i32
    %c0_i32_1 = arith.constant 0 : i32
    return %c0_i32, %c0_i32_0 : i32, i32
  }
  func.func @transform_5(%arg0: i32) -> (i32, i32) {
    %c0_i32 = arith.constant 0 : i32
    %c0_i32_0 = arith.constant 0 : i32
    %c0_i32_1 = arith.constant 0 : i32
    return %c0_i32, %c0_i32_0 : i32, i32
  }
  func.func @transform_6(%arg0: i32) -> (i32, i32) {
    %c0_i32 = arith.constant 0 : i32
    %c0_i32_0 = arith.constant 0 : i32
    return %arg0, %c0_i32 : i32, i32
  }
}

module attributes {stable_mosaic.version = 11 : i64} {
  func.func @_linear_main_kernel(%arg0: i32, %arg1: memref<24x256xf32, #tpu.memory_space<vmem>>, %arg2: memref<1x256xf32, #tpu.memory_space<vmem>>, %arg3: memref<1x256xf32, #tpu.memory_space<vmem>>, %arg4: memref<1x256xf32, #tpu.memory_space<vmem>>, %arg5: memref<256x256xbf16, #tpu.memory_space<vmem>>, %arg6: memref<2x256xf32, #tpu.memory_space<vmem>>, %arg7: memref<24x2xf32, #tpu.memory_space<vmem>>) attributes {dimension_semantics = [#tpu.dimension_semantics<parallel>], iteration_bounds = array<i64: 2>, scalar_prefetch = 0 : i64, scratch_operands = 0 : i64, tpu.core_type = #tpu.core_type<tc>, window_params = [{transform_indices = @transform_0, window_bounds = array<i64: 24, 256>}, {pipeline_mode = #tpu.pipeline_mode<synchronous>, transform_indices = @transform_1, window_bounds = array<i64: 1, 256>}, {pipeline_mode = #tpu.pipeline_mode<synchronous>, transform_indices = @transform_2, window_bounds = array<i64: 1, 256>}, {pipeline_mode = #tpu.pipeline_mode<synchronous>, transform_indices = @transform_3, window_bounds = array<i64: 1, 256>}, {pipeline_mode = #tpu.pipeline_mode<synchronous>, transform_indices = @transform_4, window_bounds = array<i64: 256, 256>}, {pipeline_mode = #tpu.pipeline_mode<synchronous>, transform_indices = @transform_5, window_bounds = array<i64: 2, 256>}, {transform_indices = @transform_6, window_bounds = array<i64: 24, 2>}]} {
    %c0 = arith.constant 0 : index
    %c0_0 = arith.constant 0 : index
    %0 = vector.load %arg1[%c0, %c0_0] : memref<24x256xf32, #tpu.memory_space<vmem>>, vector<24x256xf32>
    %c0_1 = arith.constant 0 : index
    %c0_2 = arith.constant 0 : index
    %1 = vector.load %arg2[%c0_1, %c0_2] : memref<1x256xf32, #tpu.memory_space<vmem>>, vector<1x256xf32>
    %2 = vector.broadcast %1 : vector<1x256xf32> to vector<24x256xf32>
    %3 = arith.mulf %0, %2 : vector<24x256xf32>
    %c0_3 = arith.constant 0 : index
    %c0_4 = arith.constant 0 : index
    %4 = vector.load %arg3[%c0_3, %c0_4] : memref<1x256xf32, #tpu.memory_space<vmem>>, vector<1x256xf32>
    %5 = vector.broadcast %4 : vector<1x256xf32> to vector<24x256xf32>
    %6 = arith.addf %3, %5 : vector<24x256xf32>
    %7 = arith.truncf %6 : vector<24x256xf32> to vector<24x256xbf16>
    %c0_5 = arith.constant 0 : index
    %c0_6 = arith.constant 0 : index
    %8 = vector.load %arg5[%c0_5, %c0_6] : memref<256x256xbf16, #tpu.memory_space<vmem>>, vector<256x256xbf16>
    %cst = arith.constant dense<0.000000e+00> : vector<24x256xf32>
    %9 = tpu.matmul %7, %8, %cst {dimension_numbers = #tpu.dot_dimension_numbers<[1], [0], [0], [1], [0, 0, 1, 1], [], []>} : vector<24x256xbf16>, vector<256x256xbf16>, vector<24x256xf32> -> vector<24x256xf32>
    %10 = arith.mulf %6, %6 : vector<24x256xf32>
    %c255_i32 = arith.constant 255 : i32
    %11 = tpu.dynamic_rotate %10 by %c255_i32 dim 1 : vector<24x256xf32>, i32 -> vector<24x256xf32>
    %c1_i32 = arith.constant 1 : i32
    %12 = tpu.dynamic_rotate %10 by %c1_i32 dim 1 : vector<24x256xf32>, i32 -> vector<24x256xf32>
    %c0_7 = arith.constant 0 : index
    %c0_8 = arith.constant 0 : index
    %13 = vector.load %arg4[%c0_7, %c0_8] : memref<1x256xf32, #tpu.memory_space<vmem>>, vector<1x256xf32>
    %14 = vector.broadcast %13 : vector<1x256xf32> to vector<24x256xf32>
    %15 = arith.mulf %14, %11 : vector<24x256xf32>
    %16 = arith.addf %10, %15 : vector<24x256xf32>
    %cst_9 = arith.constant 1.000000e+00 : f32
    %17 = vector.broadcast %cst_9 : f32 to vector<1x256xf32>
    %18 = arith.subf %17, %13 : vector<1x256xf32>
    %19 = vector.broadcast %18 : vector<1x256xf32> to vector<24x256xf32>
    %20 = arith.mulf %19, %12 : vector<24x256xf32>
    %21 = arith.addf %16, %20 : vector<24x256xf32>
    %22 = arith.mulf %21, %9 : vector<24x256xf32>
    %c0_10 = arith.constant 0 : index
    %c0_11 = arith.constant 0 : index
    %23 = vector.load %arg6[%c0_10, %c0_11] : memref<2x256xf32, #tpu.memory_space<vmem>>, vector<1x256xf32>
    %24 = vector.broadcast %23 : vector<1x256xf32> to vector<24x256xf32>
    %25 = arith.mulf %22, %24 : vector<24x256xf32>
    %cst_12 = arith.constant dense<0.000000e+00> : vector<24xf32>
    %26 = vector.multi_reduction <add>, %25, %cst_12 [1] : vector<24x256xf32> to vector<24xf32>
    %27 = vector.shape_cast %26 : vector<24xf32> to vector<24x1xf32>
    %c1 = arith.constant 1 : index
    %c0_13 = arith.constant 0 : index
    %28 = vector.load %arg6[%c1, %c0_13] : memref<2x256xf32, #tpu.memory_space<vmem>>, vector<1x256xf32>
    %29 = vector.broadcast %28 : vector<1x256xf32> to vector<24x256xf32>
    %30 = arith.mulf %22, %29 : vector<24x256xf32>
    %cst_14 = arith.constant dense<0.000000e+00> : vector<24xf32>
    %31 = vector.multi_reduction <add>, %30, %cst_14 [1] : vector<24x256xf32> to vector<24xf32>
    %32 = vector.shape_cast %31 : vector<24xf32> to vector<24x1xf32>
    %33 = tpu.concatenate %27, %32 in 1 : vector<24x1xf32>, vector<24x1xf32> -> vector<24x2xf32>
    %c0_15 = arith.constant 0 : index
    %c0_16 = arith.constant 0 : index
    %34 = vector.load %arg7[%c0_15, %c0_16] : memref<24x2xf32, #tpu.memory_space<vmem>>, vector<24x2xf32>
    tpu.vector_store %arg7[%c0_15, %c0_16], %33 {strides = array<i32>} : memref<24x2xf32, #tpu.memory_space<vmem>>, vector<24x2xf32>,
    return
  }
  func.func @transform_0(%arg0: i32) -> (i32, i32) {
    %c0_i32 = arith.constant 0 : i32
    %c0_i32_0 = arith.constant 0 : i32
    return %arg0, %c0_i32 : i32, i32
  }
  func.func @transform_1(%arg0: i32) -> (i32, i32) {
    %c0_i32 = arith.constant 0 : i32
    %c0_i32_0 = arith.constant 0 : i32
    %c0_i32_1 = arith.constant 0 : i32
    return %c0_i32, %c0_i32_0 : i32, i32
  }
  func.func @transform_2(%arg0: i32) -> (i32, i32) {
    %c0_i32 = arith.constant 0 : i32
    %c0_i32_0 = arith.constant 0 : i32
    %c0_i32_1 = arith.constant 0 : i32
    return %c0_i32, %c0_i32_0 : i32, i32
  }
  func.func @transform_3(%arg0: i32) -> (i32, i32) {
    %c0_i32 = arith.constant 0 : i32
    %c0_i32_0 = arith.constant 0 : i32
    %c0_i32_1 = arith.constant 0 : i32
    return %c0_i32, %c0_i32_0 : i32, i32
  }
  func.func @transform_4(%arg0: i32) -> (i32, i32) {
    %c0_i32 = arith.constant 0 : i32
    %c0_i32_0 = arith.constant 0 : i32
    %c0_i32_1 = arith.constant 0 : i32
    return %c0_i32, %c0_i32_0 : i32, i32
  }
  func.func @transform_5(%arg0: i32) -> (i32, i32) {
    %c0_i32 = arith.constant 0 : i32
    %c0_i32_0 = arith.constant 0 : i32
    %c0_i32_1 = arith.constant 0 : i32
    return %c0_i32, %c0_i32_0 : i32, i32
  }
  func.func @transform_6(%arg0: i32) -> (i32, i32) {
    %c0_i32 = arith.constant 0 : i32
    %c0_i32_0 = arith.constant 0 : i32
    return %arg0, %c0_i32 : i32, i32
  }
}

</mosaic_0001>

<llo_original>
// kernel: tpu_custom_call.1
$region0: #{tpu_custom_call.1}
  #allocation0 [shape = 'u32[]', space=smem, size = 0x4, offset = 0x4, fixed_abs, tag = 'smem constant byte address 0x4 - core index']
  #allocation1 [shape = 'u32[72,128]{1,0:T(1,128)}', space=vmem, size = 0x9000, scoped, tag = 'internal scratch']
  %s0 = inlined_call_operand.hbm [shape: f32[48,256], index: 0, kind: input, shape index: {}]
  %s1 = inlined_call_operand.hbm [shape: f32[1,256], index: 1, kind: input, shape index: {}]
  %s2 = inlined_call_operand.hbm [shape: f32[1,256], index: 2, kind: input, shape index: {}]
  %s3 = inlined_call_operand.hbm [shape: f32[1,256], index: 3, kind: input, shape index: {}]
  %s4 = inlined_call_operand.hbm [shape: bf16[256,256], index: 4, kind: input, shape index: {}]
  %s5 = inlined_call_operand.vmem [shape: f32[2,256], index: 5, kind: input, shape index: {}]
  %s6 = inlined_call_operand.vmem [shape: f32[48,2], index: 6, kind: output, shape index: {}]
  %s7 = sld [smem:[#allocation0]]
  $region77: #{tpu_custom_call.1} parent=0
    _
  %s9 = ssub.s32 1, %s7
  %s10 = scalar_select 0, %s9, %s7
  $region1: #{tpu_custom_call.1} parent=0
    #allocation2 [shape = 'u8[49152]{0}', space=vmem, size = 0xc000, scoped, tag = 'input window, operand 0']
    #allocation3 [shape = 's32[2]{0}', space=sflag, size = 0x8, scoped, tag = 'scoped memory for tpu_custom_call.1']
    #allocation4 [shape = 'u8[1024]{0}', space=vmem, size = 0x400, scoped, tag = 'input window, operand 1, single buffered']
    #allocation5 [shape = 's32[1]{0}', space=sflag, size = 0x4, scoped, tag = 'scoped memory for tpu_custom_call.1']
    #allocation6 [shape = 'u8[1024]{0}', space=vmem, size = 0x400, scoped, tag = 'input window, operand 2, single buffered']
    #allocation7 [shape = 'u8[1024]{0}', space=vmem, size = 0x400, scoped, tag = 'input window, operand 3, single buffered']
    #allocation8 [shape = 's32[1]{0}', space=sflag, size = 0x4, scoped, tag = 'scoped memory for tpu_custom_call.1']
    #allocation9 [shape = 'u8[131072]{0}', space=vmem, size = 0x20000, scoped, tag = 'input window, operand 4, single buffered']
    %11 = vsyncpa [#allocation3], 0
    %s12 = scalar_lea.sflag [#allocation3], 1
    %13 = vsyncpa %s12, 0
    %14 = vsyncpa [#allocation5], 0
    %15 = vsyncpa [#allocation8], 0
    loop: start=0, step=1, limit=4
    $region2: #{tpu_custom_call.1} parent=1 // loop_pre_header
      _
    $region3: #{tpu_custom_call.1} parent=1 // loop_header
      %s17 = sphi 0, %s21
      %p18 = scmp.ge.s32.totalorder %s17, 4
      %s27 = sphi 0, %s29
      %s30 = sphi 0, %s27
      %s31 = sphi 0, %s30
      %s47 = sphi 0, %s31
      %s51 = sphi 0, %s51
      %s53 = sphi 0, %s51
      %s54 = sphi 0, %s53
      %s68 = sphi 0, %s54
      %s72 = sphi 0, %s72
      %s74 = sphi 0, %s72
      %s75 = sphi 0, %s74
      %s89 = sphi 0, %s75
      %s93 = sphi 0, %s93
      %s95 = sphi 0, %s93
      %s96 = sphi 0, %s95
      %s110 = sphi 0, %s96
      %s114 = sphi 0, %s114
      %s116 = sphi 0, %s114
      %s117 = sphi 0, %s116
      %s131 = sphi 0, %s117
      %s135 = sphi 0, %s135
      %s137 = sphi 0, %s135
      %s138 = sphi 0, %s137
      %s152 = sphi 0, %s138
      %s158 = sphi 0, %s160
      %s161 = sphi 0, %s158
      %s162 = sphi 0, %s161
      %s178 = sphi 0, %s162
    $region4: #{tpu_custom_call.1} parent=1 // loop_header_branch
      %20 = sbr.rel (%p18) target = $region8
    $region5: #{tpu_custom_call.1} parent=1 // loop_body
      %s22 = ssub.s32 %s17, 1
      %s23 = ssub.s32 %s17, 2
      %s24 = sadd.s32 %s17, 1
      %s25 = ssub.s32 %s17, %s24
      %p26 = scmp.eq.s32.totalorder %s25, 0
      %s28 = sadd.s32 %s27, 1
      %s29 = scalar_select %p26, %s27, %s28
      %p32 = pneg %p26
      %p33 = scmp.eq.s32.totalorder %s17, 1
      %p34 = por %p32, %p33
      %p35 = scmp.ne.s32.totalorder %s27, %s30
      %p36 = scmp.eq.s32.totalorder %s17, 0
      %p37 = por %p35, %p36
      %p38 = scmp.ne.s32.totalorder %s27, %s30
      %p39 = scmp.eq.s32.totalorder %s22, 1
      %p40 = por %p38, %p39
      %p41 = scmp.ne.s32.totalorder %s30, %s31
      %p42 = scmp.eq.s32.totalorder %s22, 0
      %p43 = por %p41, %p42
      %p44 = scmp.ne.s32.totalorder %s30, %s31
      %p45 = scmp.eq.s32.totalorder %s23, 1
      %p46 = por %p44, %p45
      %p48 = scmp.ne.s32.totalorder %s31, %s47
      %p49 = scmp.eq.s32.totalorder %s23, 0
      %p50 = por %p48, %p49
      %s52 = sadd.s32 %s51, 1
      %p55 = scmp.eq.s32.totalorder %s17, 1
      %p56 = scmp.ne.s32.totalorder %s51, %s53
      %p57 = scmp.eq.s32.totalorder %s17, 0
      %p58 = por %p56, %p57
      %p59 = scmp.ne.s32.totalorder %s51, %s53
      %p60 = scmp.eq.s32.totalorder %s22, 1
      %p61 = por %p59, %p60
      %p62 = scmp.ne.s32.totalorder %s53, %s54
      %p63 = scmp.eq.s32.totalorder %s22, 0
      %p64 = por %p62, %p63
      %p65 = scmp.ne.s32.totalorder %s53, %s54
      %p66 = scmp.eq.s32.totalorder %s23, 1
      %p67 = por %p65, %p66
      %p69 = scmp.ne.s32.totalorder %s54, %s68
      %p70 = scmp.eq.s32.totalorder %s23, 0
      %p71 = por %p69, %p70
      %s73 = sadd.s32 %s72, 1
      %p76 = scmp.eq.s32.totalorder %s17, 1
      %p77 = scmp.ne.s32.totalorder %s72, %s74
      %p78 = scmp.eq.s32.totalorder %s17, 0
      %p79 = por %p77, %p78
      %p80 = scmp.ne.s32.totalorder %s72, %s74
      %p81 = scmp.eq.s32.totalorder %s22, 1
      %p82 = por %p80, %p81
      %p83 = scmp.ne.s32.totalorder %s74, %s75
      %p84 = scmp.eq.s32.totalorder %s22, 0
      %p85 = por %p83, %p84
      %p86 = scmp.ne.s32.totalorder %s74, %s75
      %p87 = scmp.eq.s32.totalorder %s23, 1
      %p88 = por %p86, %p87
      %p90 = scmp.ne.s32.totalorder %s75, %s89
      %p91 = scmp.eq.s32.totalorder %s23, 0
      %p92 = por %p90, %p91
      %s94 = sadd.s32 %s93, 1
      %p97 = scmp.eq.s32.totalorder %s17, 1
      %p98 = scmp.ne.s32.totalorder %s93, %s95
      %p99 = scmp.eq.s32.totalorder %s17, 0
      %p100 = por %p98, %p99
      %p101 = scmp.ne.s32.totalorder %s93, %s95
      %p102 = scmp.eq.s32.totalorder %s22, 1
      %p103 = por %p101, %p102
      %p104 = scmp.ne.s32.totalorder %s95, %s96
      %p105 = scmp.eq.s32.totalorder %s22, 0
      %p106 = por %p104, %p105
      %p107 = scmp.ne.s32.totalorder %s95, %s96
      %p108 = scmp.eq.s32.totalorder %s23, 1
      %p109 = por %p107, %p108
      %p111 = scmp.ne.s32.totalorder %s96, %s110
      %p112 = scmp.eq.s32.totalorder %s23, 0
      %p113 = por %p111, %p112
      %s115 = sadd.s32 %s114, 1
      %p118 = scmp.eq.s32.totalorder %s17, 1
      %p119 = scmp.ne.s32.totalorder %s114, %s116
      %p120 = scmp.eq.s32.totalorder %s17, 0
      %p121 = por %p119, %p120
      %p122 = scmp.ne.s32.totalorder %s114, %s116
      %p123 = scmp.eq.s32.totalorder %s22, 1
      %p124 = por %p122, %p123
      %p125 = scmp.ne.s32.totalorder %s116, %s117
      %p126 = scmp.eq.s32.totalorder %s22, 0
      %p127 = por %p125, %p126
      %p128 = scmp.ne.s32.totalorder %s116, %s117
      %p129 = scmp.eq.s32.totalorder %s23, 1
      %p130 = por %p128, %p129
      %p132 = scmp.ne.s32.totalorder %s117, %s131
      %p133 = scmp.eq.s32.totalorder %s23, 0
      %p134 = por %p132, %p133
      %s136 = sadd.s32 %s135, 1
      %p139 = scmp.eq.s32.totalorder %s17, 1
      %p140 = scmp.ne.s32.totalorder %s135, %s137
      %p141 = scmp.eq.s32.totalorder %s17, 0
      %p142 = por %p140, %p141
      %p143 = scmp.ne.s32.totalorder %s135, %s137
      %p144 = scmp.eq.s32.totalorder %s22, 1
      %p145 = por %p143, %p144
      %p146 = scmp.ne.s32.totalorder %s137, %s138
      %p147 = scmp.eq.s32.totalorder %s22, 0
      %p148 = por %p146, %p147
      %p149 = scmp.ne.s32.totalorder %s137, %s138
      %p150 = scmp.eq.s32.totalorder %s23, 1
      %p151 = por %p149, %p150
      %p153 = scmp.ne.s32.totalorder %s138, %s152
      %p154 = scmp.eq.s32.totalorder %s23, 0
      %p155 = por %p153, %p154
      %s156 = ssub.s32 %s17, %s24
      %p157 = scmp.eq.s32.totalorder %s156, 0
      %s159 = sadd.s32 %s158, 1
      %s160 = scalar_select %p157, %s158, %s159
      %p163 = pneg %p157
      %p164 = scmp.eq.s32.totalorder %s17, 1
      %p165 = por %p163, %p164
      %p166 = scmp.ne.s32.totalorder %s158, %s161
      %p167 = scmp.eq.s32.totalorder %s17, 0
      %p168 = por %p166, %p167
      %p169 = scmp.ne.s32.totalorder %s158, %s161
      %p170 = scmp.eq.s32.totalorder %s22, 1
      %p171 = por %p169, %p170
      %p172 = scmp.ne.s32.totalorder %s161, %s162
      %p173 = scmp.eq.s32.totalorder %s22, 0
      %p174 = por %p172, %p173
      %p175 = scmp.ne.s32.totalorder %s161, %s162
      %p176 = scmp.eq.s32.totalorder %s23, 1
      %p177 = por %p175, %p176
      %p179 = scmp.ne.s32.totalorder %s162, %s178
      %p180 = scmp.eq.s32.totalorder %s23, 0
      %p181 = por %p179, %p180
      %p182 = scmp.le.s32.totalorder 1, %s17
      %p183 = scmp.lt.s32.totalorder %s17, 3
      %p184 = pnand %p182, %p183
      %p185 = pneg %p184
      // Predicated region
      $region9: #{tpu_custom_call.1} parent=5 // pred_check
        _
      $region10: #{tpu_custom_call.1} parent=5 // pred_check_branch
        %187 = sbr.rel (%p184) target = $region12
      $region11: #{tpu_custom_call.1} parent=5 // pred_region
        %s188 = ssub.s32 %s17, 1
        // Predicated region
        $region13: #{tpu_custom_call.1} parent=11 // pred_check
          %p189 = pneg %p64
        $region14: #{tpu_custom_call.1} parent=11 // pred_check_branch
          %191 = sbr.rel (%p189) target = $region16
        $region15: #{tpu_custom_call.1} parent=11 // pred_region
          %193 = vsyncadd [#allocation5], 0
          %s195 = sshll.u32 %s1, 4
          %s196 = int_to_ptr.hbm [resolvable:$true] %s195
          %s197 = sshll.u32 [#allocation4], 4
          %s198 = int_to_ptr.vmem [resolvable:$true] %s197
          %200 = dma.hbm_to_vmem [thread:$0]  %s196, 32, %s198, [#allocation5]
        $region16: #{tpu_custom_call.1} parent=11 // pred_fallthru
          _
        // Predicated region
        $region17: #{tpu_custom_call.1} parent=11 // pred_check
          %p201 = pneg %p85
        $region18: #{tpu_custom_call.1} parent=11 // pred_check_branch
          %203 = sbr.rel (%p201) target = $region20
        $region19: #{tpu_custom_call.1} parent=11 // pred_region
          %205 = vsyncadd [#allocation5], 0
          %s207 = sshll.u32 %s2, 4
          %s208 = int_to_ptr.hbm [resolvable:$true] %s207
          %s209 = sshll.u32 [#allocation6], 4
          %s210 = int_to_ptr.vmem [resolvable:$true] %s209
          %212 = dma.hbm_to_vmem [thread:$0]  %s208, 32, %s210, [#allocation5]
        $region20: #{tpu_custom_call.1} parent=11 // pred_fallthru
          _
        // Predicated region
        $region21: #{tpu_custom_call.1} parent=11 // pred_check
          %p213 = pneg %p106
        $region22: #{tpu_custom_call.1} parent=11 // pred_check_branch
          %215 = sbr.rel (%p213) target = $region24
        $region23: #{tpu_custom_call.1} parent=11 // pred_region
          %217 = vsyncadd [#allocation8], 0
          %s219 = sshll.u32 %s3, 4
          %s220 = int_to_ptr.hbm [resolvable:$true] %s219
          %s221 = sshll.u32 [#allocation7], 4
          %s222 = int_to_ptr.vmem [resolvable:$true] %s221
          %224 = dma.hbm_to_vmem [thread:$0]  %s220, 32, %s222, [#allocation8]
        $region24: #{tpu_custom_call.1} parent=11 // pred_fallthru
          _
        // Predicated region
        $region25: #{tpu_custom_call.1} parent=11 // pred_check
          %p225 = pneg %p127
        $region26: #{tpu_custom_call.1} parent=11 // pred_check_branch
          %227 = sbr.rel (%p225) target = $region28
        $region27: #{tpu_custom_call.1} parent=11 // pred_region
          %229 = vsyncadd [#allocation8], 0
          %s230 = sshll.u32 %s4, 4
          %s231 = int_to_ptr.hbm [resolvable:$true] %s230
          %s232 = sshll.u32 [#allocation9], 4
          %s233 = int_to_ptr.vmem [resolvable:$true] %s232
          %238 = dma.hbm_to_vmem [thread:$0]  %s231, 4096, %s233, [#allocation8], 128, 128, 8
        $region28: #{tpu_custom_call.1} parent=11 // pred_fallthru
          _
        // Predicated region
        $region29: #{tpu_custom_call.1} parent=11 // pred_check
          %p239 = pneg %p148
        $region30: #{tpu_custom_call.1} parent=11 // pred_check_branch
          %241 = sbr.rel (%p239) target = $region32
        $region31: #{tpu_custom_call.1} parent=11 // pred_region
          _
        $region32: #{tpu_custom_call.1} parent=11 // pred_fallthru
          _
      $region12: #{tpu_custom_call.1} parent=5 // pred_fallthru
        _
      %p242 = scmp.lt.s32.totalorder %s17, 2
      // Predicated region
      $region33: #{tpu_custom_call.1} parent=5 // pred_check
        %p243 = pneg %p242
      $region34: #{tpu_custom_call.1} parent=5 // pred_check_branch
        %245 = sbr.rel (%p243) target = $region36
      $region35: #{tpu_custom_call.1} parent=5 // pred_region
        // Predicated region
        $region37: #{tpu_custom_call.1} parent=35 // pred_check
          %p246 = pneg %p37
        $region38: #{tpu_custom_call.1} parent=35 // pred_check_branch
          %248 = sbr.rel (%p246) target = $region40
        $region39: #{tpu_custom_call.1} parent=35 // pred_region
          %s249 = sand.u32 %s27, 1
          %s250 = scalar_lea.sflag [#allocation3], %s249
          %s251 = sand.u32 %s27, 1
          %s252 = smul.addr %s251, 48
          %s253 = scalar_lea.vmem [#allocation2], %s252
          %s254 = smul.u32 3, %s17
          %256 = vsyncadd %s250, 0
          %s257 = smul.addr %s254, 2
          %s258 = smul.addr %s257, 8
          %s259 = scalar_lea.hbm %s0, %s258
          %s260 = sshll.u32 %s259, 4
          %s261 = int_to_ptr.hbm [resolvable:$true] %s260
          %s262 = sshll.u32 %s253, 4
          %s263 = int_to_ptr.vmem [resolvable:$true] %s262
          %268 = dma.hbm_to_vmem [thread:$0]  %s261, 768, %s263, %s250, 256, 256, 16
        $region40: #{tpu_custom_call.1} parent=35 // pred_fallthru
          _
      $region36: #{tpu_custom_call.1} parent=5 // pred_fallthru
        _
      %p269 = scmp.le.s32.totalorder 1, %s17
      %p270 = scmp.lt.s32.totalorder %s17, 3
      %p271 = pnand %p269, %p270
      %p272 = pneg %p271
      // Predicated region
      $region41: #{tpu_custom_call.1} parent=5 // pred_check
        _
      $region42: #{tpu_custom_call.1} parent=5 // pred_check_branch
        %274 = sbr.rel (%p271) target = $region44
      $region43: #{tpu_custom_call.1} parent=5 // pred_region
        %s275 = ssub.s32 %s17, 1
        %s276 = sand.u32 %s30, 1
        %s277 = scalar_lea.sflag [#allocation3], %s276
        %s278 = sand.u32 %s30, 1
        %s279 = smul.addr %s278, 48
        %s280 = scalar_lea.vmem [#allocation2], %s279
        // Predicated region
        $region45: #{tpu_custom_call.1} parent=43 // pred_check
          %p281 = pneg %p43
        $region46: #{tpu_custom_call.1} parent=43 // pred_check_branch
          %283 = sbr.rel (%p281) target = $region48
        $region47: #{tpu_custom_call.1} parent=43 // pred_region
          %285 = dma.done %s277, 768
        $region48: #{tpu_custom_call.1} parent=43 // pred_fallthru
          _
        // Predicated region
        $region49: #{tpu_custom_call.1} parent=43 // pred_check
          %p286 = pneg %p64
        $region50: #{tpu_custom_call.1} parent=43 // pred_check_branch
          %288 = sbr.rel (%p286) target = $region52
        $region51: #{tpu_custom_call.1} parent=43 // pred_region
          %290 = dma.done [#allocation5], 32
        $region52: #{tpu_custom_call.1} parent=43 // pred_fallthru
          _
        // Predicated region
        $region53: #{tpu_custom_call.1} parent=43 // pred_check
          %p291 = pneg %p85
        $region54: #{tpu_custom_call.1} parent=43 // pred_check_branch
          %293 = sbr.rel (%p291) target = $region56
        $region55: #{tpu_custom_call.1} parent=43 // pred_region
          %295 = dma.done [#allocation5], 32
        $region56: #{tpu_custom_call.1} parent=43 // pred_fallthru
          _
        // Predicated region
        $region57: #{tpu_custom_call.1} parent=43 // pred_check
          %p296 = pneg %p106
        $region58: #{tpu_custom_call.1} parent=43 // pred_check_branch
          %298 = sbr.rel (%p296) target = $region60
        $region59: #{tpu_custom_call.1} parent=43 // pred_region
          %300 = dma.done [#allocation8], 32
        $region60: #{tpu_custom_call.1} parent=43 // pred_fallthru
          _
        // Predicated region
        $region61: #{tpu_custom_call.1} parent=43 // pred_check
          %p301 = pneg %p127
        $region62: #{tpu_custom_call.1} parent=43 // pred_check_branch
          %303 = sbr.rel (%p301) target = $region64
        $region63: #{tpu_custom_call.1} parent=43 // pred_region
          %305 = dma.done [#allocation8], 4096
        $region64: #{tpu_custom_call.1} parent=43 // pred_fallthru
          _
        %s306 = sand.u32 %s30, 1
        %s307 = scalar_lea.sflag [#allocation3], %s306
        %s308 = sand.u32 %s30, 1
        %s309 = smul.addr %s308, 48
        %s310 = scalar_lea.vmem [#allocation2], %s309
        %p311 = pneg %p43
        %p312 = pneg %p40
        %p313 = pneg %p64
        %p314 = pneg %p61
        %p315 = pneg %p85
        %p316 = pneg %p82
        %p317 = pneg %p106
        %p318 = pneg %p103
        %p319 = pneg %p127
        %p320 = pneg %p124
        %p321 = pneg %p148
        %p322 = pneg %p145
        %p323 = pneg %p174
        %p324 = pneg %p171
        %s325 = smul.u32 3, %s22
        %p326 = scmp.lt.s32.totalorder %s325, 5
        %s327 = scalar_select %p326, %s325, 5
        %s328 = smul.addr %s327, 8
        %s329 = scalar_lea.vmem %s6, %s328
        %s330 = smul.u32 3, %s22
        %s331 = smul.u32 3, %s22
        %p332 = scmp.lt.s32.totalorder %s331, 5
        %s333 = scalar_select %p332, %s331, 5
        %s334 = smul.addr %s333, 8
        %s335 = scalar_lea.vmem %s6, %s334
        %s336 = smul.u32 3, %s22
        %v337 = vld [vmem:[%s280] sm:$0xff]
        %v338 = vld [vmem:[%s280 + $0x8] sm:$0xff]
        %v339 = vld [vmem:[%s280 + $0x10] sm:$0xff]
        %v340 = vld [vmem:[%s280 + $0x18] sm:$0xff]
        %v341 = vld [vmem:[%s280 + $0x20] sm:$0xff]
        %v342 = vld [vmem:[%s280 + $0x28] sm:$0xff]
        %v343 = vld [vmem:[#allocation4] sm:$0x3]
        %v345 = vperm.slane %v343, 0
        %v346 = vperm.slane %v343, 1
        %v349 = vmul.f32 %v337, %v345
        %v350 = vmul.f32 %v338, %v346
        %v351 = vmul.f32 %v339, %v345
        %v352 = vmul.f32 %v340, %v346
        %v353 = vmul.f32 %v341, %v345
        %v354 = vmul.f32 %v342, %v346
        %v355 = vld [vmem:[#allocation6] sm:$0x3]
        %v357 = vperm.slane %v355, 0
        %v358 = vperm.slane %v355, 1
        %v361 = vadd.f32 %v349, %v357
        %v362 = vadd.f32 %v350, %v358
        %v363 = vadd.f32 %v351, %v357
        %v364 = vadd.f32 %v352, %v358
        %v365 = vadd.f32 %v353, %v357
        %v366 = vadd.f32 %v354, %v358
        %v367 = vpack.c.bf16 %v363, %v361
        %v368 = vpack.c.bf16 %v364, %v362
        %v369 = vpack.c.bf16 %v365, %v365
        %v370 = vpack.c.bf16 %v366, %v366
        %v371 = vld [vmem:[#allocation9] sm:$0xff]
        %v372 = vld [vmem:[#allocation9 + $0x8] sm:$0xff]
        %v373 = vld [vmem:[#allocation9 + $0x10] sm:$0xff]
        %v374 = vld [vmem:[#allocation9 + $0x18] sm:$0xff]
        %v375 = vld [vmem:[#allocation9 + $0x20] sm:$0xff]
        %v376 = vld [vmem:[#allocation9 + $0x28] sm:$0xff]
        %v377 = vld [vmem:[#allocation9 + $0x30] sm:$0xff]
        %v378 = vld [vmem:[#allocation9 + $0x38] sm:$0xff]
        %v379 = vld [vmem:[#allocation9 + $0x40] sm:$0xff]
        %v380 = vld [vmem:[#allocation9 + $0x48] sm:$0xff]
        %v381 = vld [vmem:[#allocation9 + $0x50] sm:$0xff]
        %v382 = vld [vmem:[#allocation9 + $0x58] sm:$0xff]
        %v383 = vld [vmem:[#allocation9 + $0x60] sm:$0xff]
        %v384 = vld [vmem:[#allocation9 + $0x68] sm:$0xff]
        %v385 = vld [vmem:[#allocation9 + $0x70] sm:$0xff]
        %v386 = vld [vmem:[#allocation9 + $0x78] sm:$0xff]
        %v387 = vld [vmem:[#allocation9 + $0x80] sm:$0xff]
        %v388 = vld [vmem:[#allocation9 + $0x88] sm:$0xff]
        %v389 = vld [vmem:[#allocation9 + $0x90] sm:$0xff]
        %v390 = vld [vmem:[#allocation9 + $0x98] sm:$0xff]
        %v391 = vld [vmem:[#allocation9 + $0xa0] sm:$0xff]
        %v392 = vld [vmem:[#allocation9 + $0xa8] sm:$0xff]
        %v393 = vld [vmem:[#allocation9 + $0xb0] sm:$0xff]
        %v394 = vld [vmem:[#allocation9 + $0xb8] sm:$0xff]
        %v395 = vld [vmem:[#allocation9 + $0xc0] sm:$0xff]
        %v396 = vld [vmem:[#allocation9 + $0xc8] sm:$0xff]
        %v397 = vld [vmem:[#allocation9 + $0xd0] sm:$0xff]
        %v398 = vld [vmem:[#allocation9 + $0xd8] sm:$0xff]
        %v399 = vld [vmem:[#allocation9 + $0xe0] sm:$0xff]
        %v400 = vld [vmem:[#allocation9 + $0xe8] sm:$0xff]
        %v401 = vld [vmem:[#allocation9 + $0xf0] sm:$0xff]
        %v402 = vld [vmem:[#allocation9 + $0xf8] sm:$0xff]
        %v435 = vunpack.c.l.b16 %v371
        %v436 = vunpack.c.h.b16 %v371
        %v437 = vunpack.c.l.b16 %v372
        %v438 = vunpack.c.h.b16 %v372
        %v439 = vunpack.c.l.b16 %v373
        %v440 = vunpack.c.h.b16 %v373
        %v441 = vunpack.c.l.b16 %v374
        %v442 = vunpack.c.h.b16 %v374
        %v443 = vunpack.c.l.b16 %v375
        %v444 = vunpack.c.h.b16 %v375
        %v445 = vunpack.c.l.b16 %v376
        %v446 = vunpack.c.h.b16 %v376
        %v447 = vunpack.c.l.b16 %v377
        %v448 = vunpack.c.h.b16 %v377
        %v449 = vunpack.c.l.b16 %v378
        %v450 = vunpack.c.h.b16 %v378
        %v451 = vunpack.c.l.b16 %v379
        %v452 = vunpack.c.h.b16 %v379
        %v453 = vunpack.c.l.b16 %v380
        %v454 = vunpack.c.h.b16 %v380
        %v455 = vunpack.c.l.b16 %v381
        %v456 = vunpack.c.h.b16 %v381
        %v457 = vunpack.c.l.b16 %v382
        %v458 = vunpack.c.h.b16 %v382
        %v459 = vunpack.c.l.b16 %v383
        %v460 = vunpack.c.h.b16 %v383
        %v461 = vunpack.c.l.b16 %v384
        %v462 = vunpack.c.h.b16 %v384
        %v463 = vunpack.c.l.b16 %v385
        %v464 = vunpack.c.h.b16 %v385
        %v465 = vunpack.c.l.b16 %v386
        %v466 = vunpack.c.h.b16 %v386
        %v467 = vunpack.c.l.b16 %v387
        %v468 = vunpack.c.h.b16 %v387
        %v469 = vunpack.c.l.b16 %v388
        %v470 = vunpack.c.h.b16 %v388
        %v471 = vunpack.c.l.b16 %v389
        %v472 = vunpack.c.h.b16 %v389
        %v473 = vunpack.c.l.b16 %v390
        %v474 = vunpack.c.h.b16 %v390
        %v475 = vunpack.c.l.b16 %v391
        %v476 = vunpack.c.h.b16 %v391
        %v477 = vunpack.c.l.b16 %v392
        %v478 = vunpack.c.h.b16 %v392
        %v479 = vunpack.c.l.b16 %v393
        %v480 = vunpack.c.h.b16 %v393
        %v481 = vunpack.c.l.b16 %v394
        %v482 = vunpack.c.h.b16 %v394
        %v483 = vunpack.c.l.b16 %v395
        %v484 = vunpack.c.h.b16 %v395
        %v485 = vunpack.c.l.b16 %v396
        %v486 = vunpack.c.h.b16 %v396
        %v487 = vunpack.c.l.b16 %v397
        %v488 = vunpack.c.h.b16 %v397
        %v489 = vunpack.c.l.b16 %v398
        %v490 = vunpack.c.h.b16 %v398
        %v491 = vunpack.c.l.b16 %v399
        %v492 = vunpack.c.h.b16 %v399
        %v493 = vunpack.c.l.b16 %v400
        %v494 = vunpack.c.h.b16 %v400
        %v495 = vunpack.c.l.b16 %v401
        %v496 = vunpack.c.h.b16 %v401
        %v497 = vunpack.c.l.b16 %v402
        %v498 = vunpack.c.h.b16 %v402
        %v499 = vpack.c.b16 %v437, %v435
        %v500 = vpack.c.b16 %v438, %v436
        %v501 = vpack.c.b16 %v441, %v439
        %v502 = vpack.c.b16 %v442, %v440
        %v503 = vpack.c.b16 %v445, %v443
        %v504 = vpack.c.b16 %v446, %v444
        %v505 = vpack.c.b16 %v449, %v447
        %v506 = vpack.c.b16 %v450, %v448
        %v507 = vpack.c.b16 %v453, %v451
        %v508 = vpack.c.b16 %v454, %v452
        %v509 = vpack.c.b16 %v457, %v455
        %v510 = vpack.c.b16 %v458, %v456
        %v511 = vpack.c.b16 %v461, %v459
        %v512 = vpack.c.b16 %v462, %v460
        %v513 = vpack.c.b16 %v465, %v463
        %v514 = vpack.c.b16 %v466, %v464
        %v515 = vpack.c.b16 %v469, %v467
        %v516 = vpack.c.b16 %v470, %v468
        %v517 = vpack.c.b16 %v473, %v471
        %v518 = vpack.c.b16 %v474, %v472
        %v519 = vpack.c.b16 %v477, %v475
        %v520 = vpack.c.b16 %v478, %v476
        %v521 = vpack.c.b16 %v481, %v479
        %v522 = vpack.c.b16 %v482, %v480
        %v523 = vpack.c.b16 %v485, %v483
        %v524 = vpack.c.b16 %v486, %v484
        %v525 = vpack.c.b16 %v489, %v487
        %v526 = vpack.c.b16 %v490, %v488
        %v527 = vpack.c.b16 %v493, %v491
        %v528 = vpack.c.b16 %v494, %v492
        %v529 = vpack.c.b16 %v497, %v495
        %v530 = vpack.c.b16 %v498, %v496
        %563 = vmatpush.bf16.msra.mxu0 %v513
        %564 = vmatpush.bf16.msra.mxu0 %v511
        %565 = vmatpush.bf16.msra.mxu0 %v509
        %566 = vmatpush.bf16.msra.mxu0 %v507
        %567 = vmatpush.bf16.msra.mxu0 %v505
        %568 = vmatpush.bf16.msra.mxu0 %v503
        %569 = vmatpush.bf16.msra.mxu0 %v501
        %570 = vmatpush.bf16.msra.mxu0 %v499
        %571 = vmatmul.bf16.gmra.mxu0 %v367
        %v572 = vpop.f32.mrf.mxu0
        %v573 = vadd.f32 0.0, %v572
        %v574 = vpop.f32.mrf.mxu0
        %v575 = vadd.f32 0.0, %v574
        %576 = vmatmul.bf16.gmra.mxu0 %v369
        %v577 = vpop.f32.mrf.mxu0
        %v578 = vadd.f32 0.0, %v577
        %v579 = vpop.f32.mrf.mxu0
        %580 = vdwg.mxu0
        %581 = vmatpush.bf16.msra.mxu0 %v529
        %582 = vmatpush.bf16.msra.mxu0 %v527
        %583 = vmatpush.bf16.msra.mxu0 %v525
        %584 = vmatpush.bf16.msra.mxu0 %v523
        %585 = vmatpush.bf16.msra.mxu0 %v521
        %586 = vmatpush.bf16.msra.mxu0 %v519
        %587 = vmatpush.bf16.msra.mxu0 %v517
        %588 = vmatpush.bf16.msra.mxu0 %v515
        %589 = vmatmul.bf16.gmra.mxu0 %v368
        %v590 = vpop.f32.mrf.mxu0
        %v591 = vadd.f32 %v573, %v590
        %v592 = vpop.f32.mrf.mxu0
        %v593 = vadd.f32 %v575, %v592
        %594 = vmatmul.bf16.gmra.mxu0 %v370
        %v595 = vpop.f32.mrf.mxu0
        %v596 = vadd.f32 %v578, %v595
        %v597 = vpop.f32.mrf.mxu0
        %598 = vdwg.mxu0
        %599 = vmatpush.bf16.msra.mxu0 %v514
        %600 = vmatpush.bf16.msra.mxu0 %v512
        %601 = vmatpush.bf16.msra.mxu0 %v510
        %602 = vmatpush.bf16.msra.mxu0 %v508
        %603 = vmatpush.bf16.msra.mxu0 %v506
        %604 = vmatpush.bf16.msra.mxu0 %v504
        %605 = vmatpush.bf16.msra.mxu0 %v502
        %606 = vmatpush.bf16.msra.mxu0 %v500
        %607 = vmatmul.bf16.gmra.mxu0 %v367
        %v608 = vpop.f32.mrf.mxu0
        %v609 = vadd.f32 0.0, %v608
        %v610 = vpop.f32.mrf.mxu0
        %v611 = vadd.f32 0.0, %v610
        %612 = vmatmul.bf16.gmra.mxu0 %v369
        %v613 = vpop.f32.mrf.mxu0
        %v614 = vadd.f32 0.0, %v613
        %v615 = vpop.f32.mrf.mxu0
        %616 = vdwg.mxu0
        %617 = vmatpush.bf16.msra.mxu0 %v530
        %618 = vmatpush.bf16.msra.mxu0 %v528
        %619 = vmatpush.bf16.msra.mxu0 %v526
        %620 = vmatpush.bf16.msra.mxu0 %v524
        %621 = vmatpush.bf16.msra.mxu0 %v522
        %622 = vmatpush.bf16.msra.mxu0 %v520
        %623 = vmatpush.bf16.msra.mxu0 %v518
        %624 = vmatpush.bf16.msra.mxu0 %v516
        %625 = vmatmul.bf16.gmra.mxu0 %v368
        %v626 = vpop.f32.mrf.mxu0
        %v627 = vadd.f32 %v609, %v626
        %v628 = vpop.f32.mrf.mxu0
        %v629 = vadd.f32 %v611, %v628
        %630 = vmatmul.bf16.gmra.mxu0 %v370
        %v631 = vpop.f32.mrf.mxu0
        %v632 = vadd.f32 %v614, %v631
        %v633 = vpop.f32.mrf.mxu0
        %634 = vdwg.mxu0
        %v635 = vmul.f32 %v361, %v361
        %v636 = vmul.f32 %v362, %v362
        %v637 = vmul.f32 %v363, %v363
        %v638 = vmul.f32 %v364, %v364
        %v639 = vmul.f32 %v365, %v365
        %v640 = vmul.f32 %v366, %v366
        %641 = vrot.lane.b32.xlu0 %v635, 127
        %v642 = vpop.permute.xlu0 %641
        %643 = vrot.lane.b32.xlu0 %v637, 127
        %v644 = vpop.permute.xlu0 %643
        %645 = vrot.lane.b32.xlu0 %v639, 127
        %v646 = vpop.permute.xlu0 %645
        %647 = vrot.lane.b32.xlu0 %v636, 127
        %v648 = vpop.permute.xlu0 %647
        %649 = vrot.lane.b32.xlu0 %v638, 127
        %v650 = vpop.permute.xlu0 %649
        %651 = vrot.lane.b32.xlu0 %v640, 127
        %v652 = vpop.permute.xlu0 %651
        %v653 = vlaneseq
        %v654 = vand.u32 %v653, 127
        %vm655 = vcmp.lt.s32.totalorder %v654, 127
        %v656 = vsel %vm655, %v642, %v648
        %v657 = vsel %vm655, %v644, %v650
        %v658 = vsel %vm655, %v646, %v652
        %v659 = vsel %vm655, %v648, %v642
        %v660 = vsel %vm655, %v650, %v644
        %v661 = vsel %vm655, %v652, %v646
        %662 = vrot.lane.b32.xlu0 %v635, 1
        %v663 = vpop.permute.xlu0 %662
        %664 = vrot.lane.b32.xlu0 %v637, 1
        %v665 = vpop.permute.xlu0 %664
        %666 = vrot.lane.b32.xlu0 %v639, 1
        %v667 = vpop.permute.xlu0 %666
        %668 = vrot.lane.b32.xlu0 %v636, 1
        %v669 = vpop.permute.xlu0 %668
        %670 = vrot.lane.b32.xlu0 %v638, 1
        %v671 = vpop.permute.xlu0 %670
        %672 = vrot.lane.b32.xlu0 %v640, 1
        %v673 = vpop.permute.xlu0 %672
        %vm674 = vcmp.lt.s32.totalorder %v654, 1
        %v675 = vsel %vm674, %v663, %v669
        %v676 = vsel %vm674, %v665, %v671
        %v677 = vsel %vm674, %v667, %v673
        %v678 = vsel %vm674, %v669, %v663
        %v679 = vsel %vm674, %v671, %v665
        %v680 = vsel %vm674, %v673, %v667
        %v681 = vld [vmem:[#allocation7] sm:$0x3]
        %v683 = vperm.slane %v681, 0
        %v684 = vperm.slane %v681, 1
        %v687 = vmul.f32 %v683, %v656
        %v688 = vmul.f32 %v684, %v659
        %v689 = vmul.f32 %v683, %v657
        %v690 = vmul.f32 %v684, %v660
        %v691 = vmul.f32 %v683, %v658
        %v692 = vmul.f32 %v684, %v661
        %v693 = vadd.f32 %v635, %v687
        %v694 = vadd.f32 %v636, %v688
        %v695 = vadd.f32 %v637, %v689
        %v696 = vadd.f32 %v638, %v690
        %v697 = vadd.f32 %v639, %v691
        %v698 = vadd.f32 %v640, %v692
        %v699 = vsub.f32 1.0, %v681
        %v701 = vperm.slane %v699, 0
        %v702 = vperm.slane %v699, 1
        %v705 = vmul.f32 %v701, %v678
        %v706 = vmul.f32 %v702, %v675
        %v707 = vmul.f32 %v701, %v679
        %v708 = vmul.f32 %v702, %v676
        %v709 = vmul.f32 %v701, %v680
        %v710 = vmul.f32 %v702, %v677
        %v711 = vadd.f32 %v693, %v705
        %v712 = vadd.f32 %v694, %v706
        %v713 = vadd.f32 %v695, %v707
        %v714 = vadd.f32 %v696, %v708
        %v715 = vadd.f32 %v697, %v709
        %v716 = vadd.f32 %v698, %v710
        %v717 = vmul.f32 %v711, %v591
        %v718 = vmul.f32 %v712, %v627
        %v719 = vmul.f32 %v713, %v593
        %v720 = vmul.f32 %v714, %v629
        %v721 = vmul.f32 %v715, %v596
        %v722 = vmul.f32 %v716, %v632
        %v723 = vld [vmem:[%s5] ss:$2 sm:$0x3]
        %v725 = vperm.slane %v723, 0
        %v726 = vperm.slane %v723, 1
        %v729 = vmul.f32 %v717, %v725
        %v730 = vmul.f32 %v718, %v726
        %v731 = vmul.f32 %v719, %v725
        %v732 = vmul.f32 %v720, %v726
        %v733 = vmul.f32 %v721, %v725
        %v734 = vmul.f32 %v722, %v726
        %v735 = vadd.f32 %v729, %v730
        %736 = vadd.xlane.f32.xlu0 %v735
        %v737 = vpop.xlane.xlu0 %736
        %v738 = vadd.f32 %v731, %v732
        %739 = vadd.xlane.f32.xlu0 %v738
        %v740 = vpop.xlane.xlu0 %739
        %v741 = vadd.f32 %v733, %v734
        %742 = vadd.xlane.f32.xlu0 %v741
        %v743 = vpop.xlane.xlu0 %742
        %s744 = scalar_lea.vmem %s5, 1
        %v745 = vld [vmem:[%s744] ss:$2 sm:$0x3]
        %v747 = vperm.slane %v745, 0
        %v748 = vperm.slane %v745, 1
        %v751 = vmul.f32 %v717, %v747
        %v752 = vmul.f32 %v718, %v748
        %v753 = vmul.f32 %v719, %v747
        %v754 = vmul.f32 %v720, %v748
        %v755 = vmul.f32 %v721, %v747
        %v756 = vmul.f32 %v722, %v748
        %v757 = vadd.f32 %v751, %v752
        %758 = vadd.xlane.f32.xlu0 %v757
        %v759 = vpop.xlane.xlu0 %758
        %v760 = vadd.f32 %v753, %v754
        %761 = vadd.xlane.f32.xlu0 %v760
        %v762 = vpop.xlane.xlu0 %761
        %v763 = vadd.f32 %v755, %v756
        %764 = vadd.xlane.f32.xlu0 %v763
        %v765 = vpop.xlane.xlu0 %764
        %vm766 = vcmask 7168
        %v767 = vsel %vm766, %v737, %v759
        %v768 = vsel %vm766, %v740, %v762
        %v769 = vsel %vm766, %v743, %v765
        %vm770 = vcmask 15360
        %771 = vst.msk [vmem:[%s335] sm:$0xff] %vm770, %v767
        %772 = vst.msk [vmem:[%s335 + $0x8] sm:$0xff] %vm770, %v768
        %773 = vst.msk [vmem:[%s335 + $0x10] sm:$0xff] %vm770, %v769
        %s774 = smul.u32 3, %s22
        %p775 = scmp.lt.s32.totalorder %s774, 5
        %s776 = scalar_select %p775, %s774, 5
        %s777 = smul.addr %s776, 8
        %s778 = scalar_lea.vmem %s6, %s777
        // Predicated region
        $region65: #{tpu_custom_call.1} parent=43 // pred_check
          %p779 = pneg %p171
        $region66: #{tpu_custom_call.1} parent=43 // pred_check_branch
          %781 = sbr.rel (%p779) target = $region68
        $region67: #{tpu_custom_call.1} parent=43 // pred_region
          %s782 = smul.u32 3, %s22
        $region68: #{tpu_custom_call.1} parent=43 // pred_fallthru
          _
      $region44: #{tpu_custom_call.1} parent=5 // pred_fallthru
        _
      %p783 = scmp.le.s32.totalorder 2, %s17
      // Predicated region
      $region69: #{tpu_custom_call.1} parent=5 // pred_check
        %p784 = pneg %p783
      $region70: #{tpu_custom_call.1} parent=5 // pred_check_branch
        %786 = sbr.rel (%p784) target = $region72
      $region71: #{tpu_custom_call.1} parent=5 // pred_region
        %s787 = ssub.s32 %s17, 2
        // Predicated region
        $region73: #{tpu_custom_call.1} parent=71 // pred_check
          %p788 = pneg %p177
        $region74: #{tpu_custom_call.1} parent=71 // pred_check_branch
          %790 = sbr.rel (%p788) target = $region76
        $region75: #{tpu_custom_call.1} parent=71 // pred_region
          %s791 = smul.u32 3, %s23
          %p792 = scmp.lt.s32.totalorder %s791, 5
          %s793 = scalar_select %p792, %s791, 5
          %s794 = smul.addr %s793, 8
          %s795 = scalar_lea.vmem %s6, %s794
        $region76: #{tpu_custom_call.1} parent=71 // pred_fallthru
          _
      $region72: #{tpu_custom_call.1} parent=5 // pred_fallthru
        _
    $region6: #{tpu_custom_call.1} parent=1 // loop_footer
      %s21 = sadd.s32 1, %s17
    $region7: #{tpu_custom_call.1} parent=1 // loop_footer_branch
      %16 = sbr.rel target = $region3
    $region8: #{tpu_custom_call.1} parent=1 // loop_exit
      _
    %796 = vsyncpa [#allocation3], 1
    %s797 = scalar_lea.sflag [#allocation3], 1
    %798 = vsyncpa %s797, 1
    %799 = vsyncpa [#allocation5], 1
    %800 = vsyncpa [#allocation8], 1

// kernel: tpu_custom_call.1
$region0: #{tpu_custom_call.1}
  #allocation0 [shape = 'u32[]', space=smem, size = 0x4, offset = 0x4, fixed_abs, tag = 'smem constant byte address 0x4 - core index']
  #allocation1 [shape = 'u32[72,128]{1,0:T(1,128)}', space=vmem, size = 0x9000, scoped, tag = 'internal scratch']
  %s0 = inlined_call_operand.hbm [shape: f32[48,256], index: 0, kind: input, shape index: {}]
  %s1 = inlined_call_operand.hbm [shape: f32[1,256], index: 1, kind: input, shape index: {}]
  %s2 = inlined_call_operand.hbm [shape: f32[1,256], index: 2, kind: input, shape index: {}]
  %s3 = inlined_call_operand.hbm [shape: f32[1,256], index: 3, kind: input, shape index: {}]
  %s4 = inlined_call_operand.hbm [shape: bf16[256,256], index: 4, kind: input, shape index: {}]
  %s5 = inlined_call_operand.vmem [shape: f32[2,256], index: 5, kind: input, shape index: {}]
  %s6 = inlined_call_operand.vmem [shape: f32[48,2], index: 6, kind: output, shape index: {}]
  %s7 = sld [smem:[#allocation0]]
  $region77: #{tpu_custom_call.1} parent=0
    _
  %s9 = ssub.s32 1, %s7
  %s10 = scalar_select 0, %s9, %s7
  $region1: #{tpu_custom_call.1} parent=0
    #allocation2 [shape = 'u8[49152]{0}', space=vmem, size = 0xc000, scoped, tag = 'input window, operand 0']
    #allocation3 [shape = 's32[2]{0}', space=sflag, size = 0x8, scoped, tag = 'scoped memory for tpu_custom_call.1']
    #allocation4 [shape = 'u8[1024]{0}', space=vmem, size = 0x400, scoped, tag = 'input window, operand 1, single buffered']
    #allocation5 [shape = 's32[1]{0}', space=sflag, size = 0x4, scoped, tag = 'scoped memory for tpu_custom_call.1']
    #allocation6 [shape = 'u8[1024]{0}', space=vmem, size = 0x400, scoped, tag = 'input window, operand 2, single buffered']
    #allocation7 [shape = 'u8[1024]{0}', space=vmem, size = 0x400, scoped, tag = 'input window, operand 3, single buffered']
    #allocation8 [shape = 's32[1]{0}', space=sflag, size = 0x4, scoped, tag = 'scoped memory for tpu_custom_call.1']
    #allocation9 [shape = 'u8[131072]{0}', space=vmem, size = 0x20000, scoped, tag = 'input window, operand 4, single buffered']
    %11 = vsyncpa [#allocation3], 0
    %s12 = scalar_lea.sflag [#allocation3], 1
    %13 = vsyncpa %s12, 0
    %14 = vsyncpa [#allocation5], 0
    %15 = vsyncpa [#allocation8], 0
    loop: start=0, step=1, limit=4
    $region2: #{tpu_custom_call.1} parent=1 // loop_pre_header
      _
    $region3: #{tpu_custom_call.1} parent=1 // loop_header
      %s17 = sphi 0, %s21
      %p18 = scmp.ge.s32.totalorder %s17, 4
      %s27 = sphi 0, %s29
      %s30 = sphi 0, %s27
      %s31 = sphi 0, %s30
      %s47 = sphi 0, %s31
      %s51 = sphi 0, %s51
      %s53 = sphi 0, %s51
      %s54 = sphi 0, %s53
      %s68 = sphi 0, %s54
      %s72 = sphi 0, %s72
      %s74 = sphi 0, %s72
      %s75 = sphi 0, %s74
      %s89 = sphi 0, %s75
      %s93 = sphi 0, %s93
      %s95 = sphi 0, %s93
      %s96 = sphi 0, %s95
      %s110 = sphi 0, %s96
      %s114 = sphi 0, %s114
      %s116 = sphi 0, %s114
      %s117 = sphi 0, %s116
      %s131 = sphi 0, %s117
      %s135 = sphi 0, %s135
      %s137 = sphi 0, %s135
      %s138 = sphi 0, %s137
      %s152 = sphi 0, %s138
      %s158 = sphi 0, %s160
      %s161 = sphi 0, %s158
      %s162 = sphi 0, %s161
      %s178 = sphi 0, %s162
    $region4: #{tpu_custom_call.1} parent=1 // loop_header_branch
      %20 = sbr.rel (%p18) target = $region8
    $region5: #{tpu_custom_call.1} parent=1 // loop_body
      %s22 = ssub.s32 %s17, 1
      %s23 = ssub.s32 %s17, 2
      %s24 = sadd.s32 %s17, 1
      %s25 = ssub.s32 %s17, %s24
      %p26 = scmp.eq.s32.totalorder %s25, 0
      %s28 = sadd.s32 %s27, 1
      %s29 = scalar_select %p26, %s27, %s28
      %p32 = pneg %p26
      %p33 = scmp.eq.s32.totalorder %s17, 1
      %p34 = por %p32, %p33
      %p35 = scmp.ne.s32.totalorder %s27, %s30
      %p36 = scmp.eq.s32.totalorder %s17, 0
      %p37 = por %p35, %p36
      %p38 = scmp.ne.s32.totalorder %s27, %s30
      %p39 = scmp.eq.s32.totalorder %s22, 1
      %p40 = por %p38, %p39
      %p41 = scmp.ne.s32.totalorder %s30, %s31
      %p42 = scmp.eq.s32.totalorder %s22, 0
      %p43 = por %p41, %p42
      %p44 = scmp.ne.s32.totalorder %s30, %s31
      %p45 = scmp.eq.s32.totalorder %s23, 1
      %p46 = por %p44, %p45
      %p48 = scmp.ne.s32.totalorder %s31, %s47
      %p49 = scmp.eq.s32.totalorder %s23, 0
      %p50 = por %p48, %p49
      %s52 = sadd.s32 %s51, 1
      %p55 = scmp.eq.s32.totalorder %s17, 1
      %p56 = scmp.ne.s32.totalorder %s51, %s53
      %p57 = scmp.eq.s32.totalorder %s17, 0
      %p58 = por %p56, %p57
      %p59 = scmp.ne.s32.totalorder %s51, %s53
      %p60 = scmp.eq.s32.totalorder %s22, 1
      %p61 = por %p59, %p60
      %p62 = scmp.ne.s32.totalorder %s53, %s54
      %p63 = scmp.eq.s32.totalorder %s22, 0
      %p64 = por %p62, %p63
      %p65 = scmp.ne.s32.totalorder %s53, %s54
      %p66 = scmp.eq.s32.totalorder %s23, 1
      %p67 = por %p65, %p66
      %p69 = scmp.ne.s32.totalorder %s54, %s68
      %p70 = scmp.eq.s32.totalorder %s23, 0
      %p71 = por %p69, %p70
      %s73 = sadd.s32 %s72, 1
      %p76 = scmp.eq.s32.totalorder %s17, 1
      %p77 = scmp.ne.s32.totalorder %s72, %s74
      %p78 = scmp.eq.s32.totalorder %s17, 0
      %p79 = por %p77, %p78
      %p80 = scmp.ne.s32.totalorder %s72, %s74
      %p81 = scmp.eq.s32.totalorder %s22, 1
      %p82 = por %p80, %p81
      %p83 = scmp.ne.s32.totalorder %s74, %s75
      %p84 = scmp.eq.s32.totalorder %s22, 0
      %p85 = por %p83, %p84
      %p86 = scmp.ne.s32.totalorder %s74, %s75
      %p87 = scmp.eq.s32.totalorder %s23, 1
      %p88 = por %p86, %p87
      %p90 = scmp.ne.s32.totalorder %s75, %s89
      %p91 = scmp.eq.s32.totalorder %s23, 0
      %p92 = por %p90, %p91
      %s94 = sadd.s32 %s93, 1
      %p97 = scmp.eq.s32.totalorder %s17, 1
      %p98 = scmp.ne.s32.totalorder %s93, %s95
      %p99 = scmp.eq.s32.totalorder %s17, 0
      %p100 = por %p98, %p99
      %p101 = scmp.ne.s32.totalorder %s93, %s95
      %p102 = scmp.eq.s32.totalorder %s22, 1
      %p103 = por %p101, %p102
      %p104 = scmp.ne.s32.totalorder %s95, %s96
      %p105 = scmp.eq.s32.totalorder %s22, 0
      %p106 = por %p104, %p105
      %p107 = scmp.ne.s32.totalorder %s95, %s96
      %p108 = scmp.eq.s32.totalorder %s23, 1
      %p109 = por %p107, %p108
      %p111 = scmp.ne.s32.totalorder %s96, %s110
      %p112 = scmp.eq.s32.totalorder %s23, 0
      %p113 = por %p111, %p112
      %s115 = sadd.s32 %s114, 1
      %p118 = scmp.eq.s32.totalorder %s17, 1
      %p119 = scmp.ne.s32.totalorder %s114, %s116
      %p120 = scmp.eq.s32.totalorder %s17, 0
      %p121 = por %p119, %p120
      %p122 = scmp.ne.s32.totalorder %s114, %s116
      %p123 = scmp.eq.s32.totalorder %s22, 1
      %p124 = por %p122, %p123
      %p125 = scmp.ne.s32.totalorder %s116, %s117
      %p126 = scmp.eq.s32.totalorder %s22, 0
      %p127 = por %p125, %p126
      %p128 = scmp.ne.s32.totalorder %s116, %s117
      %p129 = scmp.eq.s32.totalorder %s23, 1
      %p130 = por %p128, %p129
      %p132 = scmp.ne.s32.totalorder %s117, %s131
      %p133 = scmp.eq.s32.totalorder %s23, 0
      %p134 = por %p132, %p133
      %s136 = sadd.s32 %s135, 1
      %p139 = scmp.eq.s32.totalorder %s17, 1
      %p140 = scmp.ne.s32.totalorder %s135, %s137
      %p141 = scmp.eq.s32.totalorder %s17, 0
      %p142 = por %p140, %p141
      %p143 = scmp.ne.s32.totalorder %s135, %s137
      %p144 = scmp.eq.s32.totalorder %s22, 1
      %p145 = por %p143, %p144
      %p146 = scmp.ne.s32.totalorder %s137, %s138
      %p147 = scmp.eq.s32.totalorder %s22, 0
      %p148 = por %p146, %p147
      %p149 = scmp.ne.s32.totalorder %s137, %s138
      %p150 = scmp.eq.s32.totalorder %s23, 1
      %p151 = por %p149, %p150
      %p153 = scmp.ne.s32.totalorder %s138, %s152
      %p154 = scmp.eq.s32.totalorder %s23, 0
      %p155 = por %p153, %p154
      %s156 = ssub.s32 %s17, %s24
      %p157 = scmp.eq.s32.totalorder %s156, 0
      %s159 = sadd.s32 %s158, 1
      %s160 = scalar_select %p157, %s158, %s159
      %p163 = pneg %p157
      %p164 = scmp.eq.s32.totalorder %s17, 1
      %p165 = por %p163, %p164
      %p166 = scmp.ne.s32.totalorder %s158, %s161
      %p167 = scmp.eq.s32.totalorder %s17, 0
      %p168 = por %p166, %p167
      %p169 = scmp.ne.s32.totalorder %s158, %s161
      %p170 = scmp.eq.s32.totalorder %s22, 1
      %p171 = por %p169, %p170
      %p172 = scmp.ne.s32.totalorder %s161, %s162
      %p173 = scmp.eq.s32.totalorder %s22, 0
      %p174 = por %p172, %p173
      %p175 = scmp.ne.s32.totalorder %s161, %s162
      %p176 = scmp.eq.s32.totalorder %s23, 1
      %p177 = por %p175, %p176
      %p179 = scmp.ne.s32.totalorder %s162, %s178
      %p180 = scmp.eq.s32.totalorder %s23, 0
      %p181 = por %p179, %p180
      %p182 = scmp.le.s32.totalorder 1, %s17
      %p183 = scmp.lt.s32.totalorder %s17, 3
      %p184 = pnand %p182, %p183
      %p185 = pneg %p184
      // Predicated region
      $region9: #{tpu_custom_call.1} parent=5 // pred_check
        _
      $region10: #{tpu_custom_call.1} parent=5 // pred_check_branch
        %187 = sbr.rel (%p184) target = $region12
      $region11: #{tpu_custom_call.1} parent=5 // pred_region
        %s188 = ssub.s32 %s17, 1
        // Predicated region
        $region13: #{tpu_custom_call.1} parent=11 // pred_check
          %p189 = pneg %p64
        $region14: #{tpu_custom_call.1} parent=11 // pred_check_branch
          %191 = sbr.rel (%p189) target = $region16
        $region15: #{tpu_custom_call.1} parent=11 // pred_region
          %193 = vsyncadd [#allocation5], 0
          %s195 = sshll.u32 %s1, 4
          %s196 = int_to_ptr.hbm [resolvable:$true] %s195
          %s197 = sshll.u32 [#allocation4], 4
          %s198 = int_to_ptr.vmem [resolvable:$true] %s197
          %200 = dma.hbm_to_vmem [thread:$0]  %s196, 32, %s198, [#allocation5]
        $region16: #{tpu_custom_call.1} parent=11 // pred_fallthru
          _
        // Predicated region
        $region17: #{tpu_custom_call.1} parent=11 // pred_check
          %p201 = pneg %p85
        $region18: #{tpu_custom_call.1} parent=11 // pred_check_branch
          %203 = sbr.rel (%p201) target = $region20
        $region19: #{tpu_custom_call.1} parent=11 // pred_region
          %205 = vsyncadd [#allocation5], 0
          %s207 = sshll.u32 %s2, 4
          %s208 = int_to_ptr.hbm [resolvable:$true] %s207
          %s209 = sshll.u32 [#allocation6], 4
          %s210 = int_to_ptr.vmem [resolvable:$true] %s209
          %212 = dma.hbm_to_vmem [thread:$0]  %s208, 32, %s210, [#allocation5]
        $region20: #{tpu_custom_call.1} parent=11 // pred_fallthru
          _
        // Predicated region
        $region21: #{tpu_custom_call.1} parent=11 // pred_check
          %p213 = pneg %p106
        $region22: #{tpu_custom_call.1} parent=11 // pred_check_branch
          %215 = sbr.rel (%p213) target = $region24
        $region23: #{tpu_custom_call.1} parent=11 // pred_region
          %217 = vsyncadd [#allocation8], 0
          %s219 = sshll.u32 %s3, 4
          %s220 = int_to_ptr.hbm [resolvable:$true] %s219
          %s221 = sshll.u32 [#allocation7], 4
          %s222 = int_to_ptr.vmem [resolvable:$true] %s221
          %224 = dma.hbm_to_vmem [thread:$0]  %s220, 32, %s222, [#allocation8]
        $region24: #{tpu_custom_call.1} parent=11 // pred_fallthru
          _
        // Predicated region
        $region25: #{tpu_custom_call.1} parent=11 // pred_check
          %p225 = pneg %p127
        $region26: #{tpu_custom_call.1} parent=11 // pred_check_branch
          %227 = sbr.rel (%p225) target = $region28
        $region27: #{tpu_custom_call.1} parent=11 // pred_region
          %229 = vsyncadd [#allocation8], 0
          %s230 = sshll.u32 %s4, 4
          %s231 = int_to_ptr.hbm [resolvable:$true] %s230
          %s232 = sshll.u32 [#allocation9], 4
          %s233 = int_to_ptr.vmem [resolvable:$true] %s232
          %238 = dma.hbm_to_vmem [thread:$0]  %s231, 4096, %s233, [#allocation8], 128, 128, 8
        $region28: #{tpu_custom_call.1} parent=11 // pred_fallthru
          _
        // Predicated region
        $region29: #{tpu_custom_call.1} parent=11 // pred_check
          %p239 = pneg %p148
        $region30: #{tpu_custom_call.1} parent=11 // pred_check_branch
          %241 = sbr.rel (%p239) target = $region32
        $region31: #{tpu_custom_call.1} parent=11 // pred_region
          _
        $region32: #{tpu_custom_call.1} parent=11 // pred_fallthru
          _
      $region12: #{tpu_custom_call.1} parent=5 // pred_fallthru
        _
      %p242 = scmp.lt.s32.totalorder %s17, 2
      // Predicated region
      $region33: #{tpu_custom_call.1} parent=5 // pred_check
        %p243 = pneg %p242
      $region34: #{tpu_custom_call.1} parent=5 // pred_check_branch
        %245 = sbr.rel (%p243) target = $region36
      $region35: #{tpu_custom_call.1} parent=5 // pred_region
        // Predicated region
        $region37: #{tpu_custom_call.1} parent=35 // pred_check
          %p246 = pneg %p37
        $region38: #{tpu_custom_call.1} parent=35 // pred_check_branch
          %248 = sbr.rel (%p246) target = $region40
        $region39: #{tpu_custom_call.1} parent=35 // pred_region
          %s249 = sand.u32 %s27, 1
          %s250 = scalar_lea.sflag [#allocation3], %s249
          %s251 = sand.u32 %s27, 1
          %s252 = smul.addr %s251, 48
          %s253 = scalar_lea.vmem [#allocation2], %s252
          %s254 = smul.u32 3, %s17
          %256 = vsyncadd %s250, 0
          %s257 = smul.addr %s254, 2
          %s258 = smul.addr %s257, 8
          %s259 = scalar_lea.hbm %s0, %s258
          %s260 = sshll.u32 %s259, 4
          %s261 = int_to_ptr.hbm [resolvable:$true] %s260
          %s262 = sshll.u32 %s253, 4
          %s263 = int_to_ptr.vmem [resolvable:$true] %s262
          %268 = dma.hbm_to_vmem [thread:$0]  %s261, 768, %s263, %s250, 256, 256, 16
        $region40: #{tpu_custom_call.1} parent=35 // pred_fallthru
          _
      $region36: #{tpu_custom_call.1} parent=5 // pred_fallthru
        _
      %p269 = scmp.le.s32.totalorder 1, %s17
      %p270 = scmp.lt.s32.totalorder %s17, 3
      %p271 = pnand %p269, %p270
      %p272 = pneg %p271
      // Predicated region
      $region41: #{tpu_custom_call.1} parent=5 // pred_check
        _
      $region42: #{tpu_custom_call.1} parent=5 // pred_check_branch
        %274 = sbr.rel (%p271) target = $region44
      $region43: #{tpu_custom_call.1} parent=5 // pred_region
        %s275 = ssub.s32 %s17, 1
        %s276 = sand.u32 %s30, 1
        %s277 = scalar_lea.sflag [#allocation3], %s276
        %s278 = sand.u32 %s30, 1
        %s279 = smul.addr %s278, 48
        %s280 = scalar_lea.vmem [#allocation2], %s279
        // Predicated region
        $region45: #{tpu_custom_call.1} parent=43 // pred_check
          %p281 = pneg %p43
        $region46: #{tpu_custom_call.1} parent=43 // pred_check_branch
          %283 = sbr.rel (%p281) target = $region48
        $region47: #{tpu_custom_call.1} parent=43 // pred_region
          %285 = dma.done %s277, 768
        $region48: #{tpu_custom_call.1} parent=43 // pred_fallthru
          _
        // Predicated region
        $region49: #{tpu_custom_call.1} parent=43 // pred_check
          %p286 = pneg %p64
        $region50: #{tpu_custom_call.1} parent=43 // pred_check_branch
          %288 = sbr.rel (%p286) target = $region52
        $region51: #{tpu_custom_call.1} parent=43 // pred_region
          %290 = dma.done [#allocation5], 32
        $region52: #{tpu_custom_call.1} parent=43 // pred_fallthru
          _
        // Predicated region
        $region53: #{tpu_custom_call.1} parent=43 // pred_check
          %p291 = pneg %p85
        $region54: #{tpu_custom_call.1} parent=43 // pred_check_branch
          %293 = sbr.rel (%p291) target = $region56
        $region55: #{tpu_custom_call.1} parent=43 // pred_region
          %295 = dma.done [#allocation5], 32
        $region56: #{tpu_custom_call.1} parent=43 // pred_fallthru
          _
        // Predicated region
        $region57: #{tpu_custom_call.1} parent=43 // pred_check
          %p296 = pneg %p106
        $region58: #{tpu_custom_call.1} parent=43 // pred_check_branch
          %298 = sbr.rel (%p296) target = $region60
        $region59: #{tpu_custom_call.1} parent=43 // pred_region
          %300 = dma.done [#allocation8], 32
        $region60: #{tpu_custom_call.1} parent=43 // pred_fallthru
          _
        // Predicated region
        $region61: #{tpu_custom_call.1} parent=43 // pred_check
          %p301 = pneg %p127
        $region62: #{tpu_custom_call.1} parent=43 // pred_check_branch
          %303 = sbr.rel (%p301) target = $region64
        $region63: #{tpu_custom_call.1} parent=43 // pred_region
          %305 = dma.done [#allocation8], 4096
        $region64: #{tpu_custom_call.1} parent=43 // pred_fallthru
          _
        %s306 = sand.u32 %s30, 1
        %s307 = scalar_lea.sflag [#allocation3], %s306
        %s308 = sand.u32 %s30, 1
        %s309 = smul.addr %s308, 48
        %s310 = scalar_lea.vmem [#allocation2], %s309
        %p311 = pneg %p43
        %p312 = pneg %p40
        %p313 = pneg %p64
        %p314 = pneg %p61
        %p315 = pneg %p85
        %p316 = pneg %p82
        %p317 = pneg %p106
        %p318 = pneg %p103
        %p319 = pneg %p127
        %p320 = pneg %p124
        %p321 = pneg %p148
        %p322 = pneg %p145
        %p323 = pneg %p174
        %p324 = pneg %p171
        %s325 = smul.u32 3, %s22
        %p326 = scmp.lt.s32.totalorder %s325, 5
        %s327 = scalar_select %p326, %s325, 5
        %s328 = smul.addr %s327, 8
        %s329 = scalar_lea.vmem %s6, %s328
        %s330 = smul.u32 3, %s22
        %s331 = smul.u32 3, %s22
        %p332 = scmp.lt.s32.totalorder %s331, 5
        %s333 = scalar_select %p332, %s331, 5
        %s334 = smul.addr %s333, 8
        %s335 = scalar_lea.vmem %s6, %s334
        %s336 = smul.u32 3, %s22
        %v337 = vld [vmem:[%s280] sm:$0xff]
        %v338 = vld [vmem:[%s280 + $0x8] sm:$0xff]
        %v339 = vld [vmem:[%s280 + $0x10] sm:$0xff]
        %v340 = vld [vmem:[%s280 + $0x18] sm:$0xff]
        %v341 = vld [vmem:[%s280 + $0x20] sm:$0xff]
        %v342 = vld [vmem:[%s280 + $0x28] sm:$0xff]
        %v343 = vld [vmem:[#allocation4] sm:$0x3]
        %v345 = vperm.slane %v343, 0
        %v346 = vperm.slane %v343, 1
        %v349 = vmul.f32 %v337, %v345
        %v350 = vmul.f32 %v338, %v346
        %v351 = vmul.f32 %v339, %v345
        %v352 = vmul.f32 %v340, %v346
        %v353 = vmul.f32 %v341, %v345
        %v354 = vmul.f32 %v342, %v346
        %v355 = vld [vmem:[#allocation6] sm:$0x3]
        %v357 = vperm.slane %v355, 0
        %v358 = vperm.slane %v355, 1
        %v361 = vadd.f32 %v349, %v357
        %v362 = vadd.f32 %v350, %v358
        %v363 = vadd.f32 %v351, %v357
        %v364 = vadd.f32 %v352, %v358
        %v365 = vadd.f32 %v353, %v357
        %v366 = vadd.f32 %v354, %v358
        %v367 = vpack.c.bf16 %v363, %v361
        %v368 = vpack.c.bf16 %v364, %v362
        %v369 = vpack.c.bf16 %v365, %v365
        %v370 = vpack.c.bf16 %v366, %v366
        %v371 = vld [vmem:[#allocation9] sm:$0xff]
        %v372 = vld [vmem:[#allocation9 + $0x8] sm:$0xff]
        %v373 = vld [vmem:[#allocation9 + $0x10] sm:$0xff]
        %v374 = vld [vmem:[#allocation9 + $0x18] sm:$0xff]
        %v375 = vld [vmem:[#allocation9 + $0x20] sm:$0xff]
        %v376 = vld [vmem:[#allocation9 + $0x28] sm:$0xff]
        %v377 = vld [vmem:[#allocation9 + $0x30] sm:$0xff]
        %v378 = vld [vmem:[#allocation9 + $0x38] sm:$0xff]
        %v379 = vld [vmem:[#allocation9 + $0x40] sm:$0xff]
        %v380 = vld [vmem:[#allocation9 + $0x48] sm:$0xff]
        %v381 = vld [vmem:[#allocation9 + $0x50] sm:$0xff]
        %v382 = vld [vmem:[#allocation9 + $0x58] sm:$0xff]
        %v383 = vld [vmem:[#allocation9 + $0x60] sm:$0xff]
        %v384 = vld [vmem:[#allocation9 + $0x68] sm:$0xff]
        %v385 = vld [vmem:[#allocation9 + $0x70] sm:$0xff]
        %v386 = vld [vmem:[#allocation9 + $0x78] sm:$0xff]
        %v387 = vld [vmem:[#allocation9 + $0x80] sm:$0xff]
        %v388 = vld [vmem:[#allocation9 + $0x88] sm:$0xff]
        %v389 = vld [vmem:[#allocation9 + $0x90] sm:$0xff]
        %v390 = vld [vmem:[#allocation9 + $0x98] sm:$0xff]
        %v391 = vld [vmem:[#allocation9 + $0xa0] sm:$0xff]
        %v392 = vld [vmem:[#allocation9 + $0xa8] sm:$0xff]
        %v393 = vld [vmem:[#allocation9 + $0xb0] sm:$0xff]
        %v394 = vld [vmem:[#allocation9 + $0xb8] sm:$0xff]
        %v395 = vld [vmem:[#allocation9 + $0xc0] sm:$0xff]
        %v396 = vld [vmem:[#allocation9 + $0xc8] sm:$0xff]
        %v397 = vld [vmem:[#allocation9 + $0xd0] sm:$0xff]
        %v398 = vld [vmem:[#allocation9 + $0xd8] sm:$0xff]
        %v399 = vld [vmem:[#allocation9 + $0xe0] sm:$0xff]
        %v400 = vld [vmem:[#allocation9 + $0xe8] sm:$0xff]
        %v401 = vld [vmem:[#allocation9 + $0xf0] sm:$0xff]
        %v402 = vld [vmem:[#allocation9 + $0xf8] sm:$0xff]
        %v435 = vunpack.c.l.b16 %v371
        %v436 = vunpack.c.h.b16 %v371
        %v437 = vunpack.c.l.b16 %v372
        %v438 = vunpack.c.h.b16 %v372
        %v439 = vunpack.c.l.b16 %v373
        %v440 = vunpack.c.h.b16 %v373
        %v441 = vunpack.c.l.b16 %v374
        %v442 = vunpack.c.h.b16 %v374
        %v443 = vunpack.c.l.b16 %v375
        %v444 = vunpack.c.h.b16 %v375
        %v445 = vunpack.c.l.b16 %v376
        %v446 = vunpack.c.h.b16 %v376
        %v447 = vunpack.c.l.b16 %v377
        %v448 = vunpack.c.h.b16 %v377
        %v449 = vunpack.c.l.b16 %v378
        %v450 = vunpack.c.h.b16 %v378
        %v451 = vunpack.c.l.b16 %v379
        %v452 = vunpack.c.h.b16 %v379
        %v453 = vunpack.c.l.b16 %v380
        %v454 = vunpack.c.h.b16 %v380
        %v455 = vunpack.c.l.b16 %v381
        %v456 = vunpack.c.h.b16 %v381
        %v457 = vunpack.c.l.b16 %v382
        %v458 = vunpack.c.h.b16 %v382
        %v459 = vunpack.c.l.b16 %v383
        %v460 = vunpack.c.h.b16 %v383
        %v461 = vunpack.c.l.b16 %v384
        %v462 = vunpack.c.h.b16 %v384
        %v463 = vunpack.c.l.b16 %v385
        %v464 = vunpack.c.h.b16 %v385
        %v465 = vunpack.c.l.b16 %v386
        %v466 = vunpack.c.h.b16 %v386
        %v467 = vunpack.c.l.b16 %v387
        %v468 = vunpack.c.h.b16 %v387
        %v469 = vunpack.c.l.b16 %v388
        %v470 = vunpack.c.h.b16 %v388
        %v471 = vunpack.c.l.b16 %v389
        %v472 = vunpack.c.h.b16 %v389
        %v473 = vunpack.c.l.b16 %v390
        %v474 = vunpack.c.h.b16 %v390
        %v475 = vunpack.c.l.b16 %v391
        %v476 = vunpack.c.h.b16 %v391
        %v477 = vunpack.c.l.b16 %v392
        %v478 = vunpack.c.h.b16 %v392
        %v479 = vunpack.c.l.b16 %v393
        %v480 = vunpack.c.h.b16 %v393
        %v481 = vunpack.c.l.b16 %v394
        %v482 = vunpack.c.h.b16 %v394
        %v483 = vunpack.c.l.b16 %v395
        %v484 = vunpack.c.h.b16 %v395
        %v485 = vunpack.c.l.b16 %v396
        %v486 = vunpack.c.h.b16 %v396
        %v487 = vunpack.c.l.b16 %v397
        %v488 = vunpack.c.h.b16 %v397
        %v489 = vunpack.c.l.b16 %v398
        %v490 = vunpack.c.h.b16 %v398
        %v491 = vunpack.c.l.b16 %v399
        %v492 = vunpack.c.h.b16 %v399
        %v493 = vunpack.c.l.b16 %v400
        %v494 = vunpack.c.h.b16 %v400
        %v495 = vunpack.c.l.b16 %v401
        %v496 = vunpack.c.h.b16 %v401
        %v497 = vunpack.c.l.b16 %v402
        %v498 = vunpack.c.h.b16 %v402
        %v499 = vpack.c.b16 %v437, %v435
        %v500 = vpack.c.b16 %v438, %v436
        %v501 = vpack.c.b16 %v441, %v439
        %v502 = vpack.c.b16 %v442, %v440
        %v503 = vpack.c.b16 %v445, %v443
        %v504 = vpack.c.b16 %v446, %v444
        %v505 = vpack.c.b16 %v449, %v447
        %v506 = vpack.c.b16 %v450, %v448
        %v507 = vpack.c.b16 %v453, %v451
        %v508 = vpack.c.b16 %v454, %v452
        %v509 = vpack.c.b16 %v457, %v455
        %v510 = vpack.c.b16 %v458, %v456
        %v511 = vpack.c.b16 %v461, %v459
        %v512 = vpack.c.b16 %v462, %v460
        %v513 = vpack.c.b16 %v465, %v463
        %v514 = vpack.c.b16 %v466, %v464
        %v515 = vpack.c.b16 %v469, %v467
        %v516 = vpack.c.b16 %v470, %v468
        %v517 = vpack.c.b16 %v473, %v471
        %v518 = vpack.c.b16 %v474, %v472
        %v519 = vpack.c.b16 %v477, %v475
        %v520 = vpack.c.b16 %v478, %v476
        %v521 = vpack.c.b16 %v481, %v479
        %v522 = vpack.c.b16 %v482, %v480
        %v523 = vpack.c.b16 %v485, %v483
        %v524 = vpack.c.b16 %v486, %v484
        %v525 = vpack.c.b16 %v489, %v487
        %v526 = vpack.c.b16 %v490, %v488
        %v527 = vpack.c.b16 %v493, %v491
        %v528 = vpack.c.b16 %v494, %v492
        %v529 = vpack.c.b16 %v497, %v495
        %v530 = vpack.c.b16 %v498, %v496
        %563 = vmatpush.bf16.msra.mxu0 %v513
        %564 = vmatpush.bf16.msra.mxu0 %v511
        %565 = vmatpush.bf16.msra.mxu0 %v509
        %566 = vmatpush.bf16.msra.mxu0 %v507
        %567 = vmatpush.bf16.msra.mxu0 %v505
        %568 = vmatpush.bf16.msra.mxu0 %v503
        %569 = vmatpush.bf16.msra.mxu0 %v501
        %570 = vmatpush.bf16.msra.mxu0 %v499
        %571 = vmatmul.bf16.gmra.mxu0 %v367
        %v572 = vpop.f32.mrf.mxu0
        %v573 = vadd.f32 0.0, %v572
        %v574 = vpop.f32.mrf.mxu0
        %v575 = vadd.f32 0.0, %v574
        %576 = vmatmul.bf16.gmra.mxu0 %v369
        %v577 = vpop.f32.mrf.mxu0
        %v578 = vadd.f32 0.0, %v577
        %v579 = vpop.f32.mrf.mxu0
        %580 = vdwg.mxu0
        %581 = vmatpush.bf16.msra.mxu0 %v529
        %582 = vmatpush.bf16.msra.mxu0 %v527
        %583 = vmatpush.bf16.msra.mxu0 %v525
        %584 = vmatpush.bf16.msra.mxu0 %v523
        %585 = vmatpush.bf16.msra.mxu0 %v521
        %586 = vmatpush.bf16.msra.mxu0 %v519
        %587 = vmatpush.bf16.msra.mxu0 %v517
        %588 = vmatpush.bf16.msra.mxu0 %v515
        %589 = vmatmul.bf16.gmra.mxu0 %v368
        %v590 = vpop.f32.mrf.mxu0
        %v591 = vadd.f32 %v573, %v590
        %v592 = vpop.f32.mrf.mxu0
        %v593 = vadd.f32 %v575, %v592
        %594 = vmatmul.bf16.gmra.mxu0 %v370
        %v595 = vpop.f32.mrf.mxu0
        %v596 = vadd.f32 %v578, %v595
        %v597 = vpop.f32.mrf.mxu0
        %598 = vdwg.mxu0
        %599 = vmatpush.bf16.msra.mxu0 %v514
        %600 = vmatpush.bf16.msra.mxu0 %v512
        %601 = vmatpush.bf16.msra.mxu0 %v510
        %602 = vmatpush.bf16.msra.mxu0 %v508
        %603 = vmatpush.bf16.msra.mxu0 %v506
        %604 = vmatpush.bf16.msra.mxu0 %v504
        %605 = vmatpush.bf16.msra.mxu0 %v502
        %606 = vmatpush.bf16.msra.mxu0 %v500
        %607 = vmatmul.bf16.gmra.mxu0 %v367
        %v608 = vpop.f32.mrf.mxu0
        %v609 = vadd.f32 0.0, %v608
        %v610 = vpop.f32.mrf.mxu0
        %v611 = vadd.f32 0.0, %v610
        %612 = vmatmul.bf16.gmra.mxu0 %v369
        %v613 = vpop.f32.mrf.mxu0
        %v614 = vadd.f32 0.0, %v613
        %v615 = vpop.f32.mrf.mxu0
        %616 = vdwg.mxu0
        %617 = vmatpush.bf16.msra.mxu0 %v530
        %618 = vmatpush.bf16.msra.mxu0 %v528
        %619 = vmatpush.bf16.msra.mxu0 %v526
        %620 = vmatpush.bf16.msra.mxu0 %v524
        %621 = vmatpush.bf16.msra.mxu0 %v522
        %622 = vmatpush.bf16.msra.mxu0 %v520
        %623 = vmatpush.bf16.msra.mxu0 %v518
        %624 = vmatpush.bf16.msra.mxu0 %v516
        %625 = vmatmul.bf16.gmra.mxu0 %v368
        %v626 = vpop.f32.mrf.mxu0
        %v627 = vadd.f32 %v609, %v626
        %v628 = vpop.f32.mrf.mxu0
        %v629 = vadd.f32 %v611, %v628
        %630 = vmatmul.bf16.gmra.mxu0 %v370
        %v631 = vpop.f32.mrf.mxu0
        %v632 = vadd.f32 %v614, %v631
        %v633 = vpop.f32.mrf.mxu0
        %634 = vdwg.mxu0
        %v635 = vmul.f32 %v361, %v361
        %v636 = vmul.f32 %v362, %v362
        %v637 = vmul.f32 %v363, %v363
        %v638 = vmul.f32 %v364, %v364
        %v639 = vmul.f32 %v365, %v365
        %v640 = vmul.f32 %v366, %v366
        %641 = vrot.lane.b32.xlu0 %v635, 127
        %v642 = vpop.permute.xlu0 %641
        %643 = vrot.lane.b32.xlu0 %v637, 127
        %v644 = vpop.permute.xlu0 %643
        %645 = vrot.lane.b32.xlu0 %v639, 127
        %v646 = vpop.permute.xlu0 %645
        %647 = vrot.lane.b32.xlu0 %v636, 127
        %v648 = vpop.permute.xlu0 %647
        %649 = vrot.lane.b32.xlu0 %v638, 127
        %v650 = vpop.permute.xlu0 %649
        %651 = vrot.lane.b32.xlu0 %v640, 127
        %v652 = vpop.permute.xlu0 %651
        %v653 = vlaneseq
        %v654 = vand.u32 %v653, 127
        %vm655 = vcmp.lt.s32.totalorder %v654, 127
        %v656 = vsel %vm655, %v642, %v648
        %v657 = vsel %vm655, %v644, %v650
        %v658 = vsel %vm655, %v646, %v652
        %v659 = vsel %vm655, %v648, %v642
        %v660 = vsel %vm655, %v650, %v644
        %v661 = vsel %vm655, %v652, %v646
        %662 = vrot.lane.b32.xlu0 %v635, 1
        %v663 = vpop.permute.xlu0 %662
        %664 = vrot.lane.b32.xlu0 %v637, 1
        %v665 = vpop.permute.xlu0 %664
        %666 = vrot.lane.b32.xlu0 %v639, 1
        %v667 = vpop.permute.xlu0 %666
        %668 = vrot.lane.b32.xlu0 %v636, 1
        %v669 = vpop.permute.xlu0 %668
        %670 = vrot.lane.b32.xlu0 %v638, 1
        %v671 = vpop.permute.xlu0 %670
        %672 = vrot.lane.b32.xlu0 %v640, 1
        %v673 = vpop.permute.xlu0 %672
        %vm674 = vcmp.lt.s32.totalorder %v654, 1
        %v675 = vsel %vm674, %v663, %v669
        %v676 = vsel %vm674, %v665, %v671
        %v677 = vsel %vm674, %v667, %v673
        %v678 = vsel %vm674, %v669, %v663
        %v679 = vsel %vm674, %v671, %v665
        %v680 = vsel %vm674, %v673, %v667
        %v681 = vld [vmem:[#allocation7] sm:$0x3]
        %v683 = vperm.slane %v681, 0
        %v684 = vperm.slane %v681, 1
        %v687 = vmul.f32 %v683, %v656
        %v688 = vmul.f32 %v684, %v659
        %v689 = vmul.f32 %v683, %v657
        %v690 = vmul.f32 %v684, %v660
        %v691 = vmul.f32 %v683, %v658
        %v692 = vmul.f32 %v684, %v661
        %v693 = vadd.f32 %v635, %v687
        %v694 = vadd.f32 %v636, %v688
        %v695 = vadd.f32 %v637, %v689
        %v696 = vadd.f32 %v638, %v690
        %v697 = vadd.f32 %v639, %v691
        %v698 = vadd.f32 %v640, %v692
        %v699 = vsub.f32 1.0, %v681
        %v701 = vperm.slane %v699, 0
        %v702 = vperm.slane %v699, 1
        %v705 = vmul.f32 %v701, %v678
        %v706 = vmul.f32 %v702, %v675
        %v707 = vmul.f32 %v701, %v679
        %v708 = vmul.f32 %v702, %v676
        %v709 = vmul.f32 %v701, %v680
        %v710 = vmul.f32 %v702, %v677
        %v711 = vadd.f32 %v693, %v705
        %v712 = vadd.f32 %v694, %v706
        %v713 = vadd.f32 %v695, %v707
        %v714 = vadd.f32 %v696, %v708
        %v715 = vadd.f32 %v697, %v709
        %v716 = vadd.f32 %v698, %v710
        %v717 = vmul.f32 %v711, %v591
        %v718 = vmul.f32 %v712, %v627
        %v719 = vmul.f32 %v713, %v593
        %v720 = vmul.f32 %v714, %v629
        %v721 = vmul.f32 %v715, %v596
        %v722 = vmul.f32 %v716, %v632
        %v723 = vld [vmem:[%s5] ss:$2 sm:$0x3]
        %v725 = vperm.slane %v723, 0
        %v726 = vperm.slane %v723, 1
        %v729 = vmul.f32 %v717, %v725
        %v730 = vmul.f32 %v718, %v726
        %v731 = vmul.f32 %v719, %v725
        %v732 = vmul.f32 %v720, %v726
        %v733 = vmul.f32 %v721, %v725
        %v734 = vmul.f32 %v722, %v726
        %v735 = vadd.f32 %v729, %v730
        %736 = vadd.xlane.f32.xlu0 %v735
        %v737 = vpop.xlane.xlu0 %736
        %v738 = vadd.f32 %v731, %v732
        %739 = vadd.xlane.f32.xlu0 %v738
        %v740 = vpop.xlane.xlu0 %739
        %v741 = vadd.f32 %v733, %v734
        %742 = vadd.xlane.f32.xlu0 %v741
        %v743 = vpop.xlane.xlu0 %742
        %s744 = scalar_lea.vmem %s5, 1
        %v745 = vld [vmem:[%s744] ss:$2 sm:$0x3]
        %v747 = vperm.slane %v745, 0
        %v748 = vperm.slane %v745, 1
        %v751 = vmul.f32 %v717, %v747
        %v752 = vmul.f32 %v718, %v748
        %v753 = vmul.f32 %v719, %v747
        %v754 = vmul.f32 %v720, %v748
        %v755 = vmul.f32 %v721, %v747
        %v756 = vmul.f32 %v722, %v748
        %v757 = vadd.f32 %v751, %v752
        %758 = vadd.xlane.f32.xlu0 %v757
        %v759 = vpop.xlane.xlu0 %758
        %v760 = vadd.f32 %v753, %v754
        %761 = vadd.xlane.f32.xlu0 %v760
        %v762 = vpop.xlane.xlu0 %761
        %v763 = vadd.f32 %v755, %v756
        %764 = vadd.xlane.f32.xlu0 %v763
        %v765 = vpop.xlane.xlu0 %764
        %vm766 = vcmask 7168
        %v767 = vsel %vm766, %v737, %v759
        %v768 = vsel %vm766, %v740, %v762
        %v769 = vsel %vm766, %v743, %v765
        %vm770 = vcmask 15360
        %771 = vst.msk [vmem:[%s335] sm:$0xff] %vm770, %v767
        %772 = vst.msk [vmem:[%s335 + $0x8] sm:$0xff] %vm770, %v768
        %773 = vst.msk [vmem:[%s335 + $0x10] sm:$0xff] %vm770, %v769
        %s774 = smul.u32 3, %s22
        %p775 = scmp.lt.s32.totalorder %s774, 5
        %s776 = scalar_select %p775, %s774, 5
        %s777 = smul.addr %s776, 8
        %s778 = scalar_lea.vmem %s6, %s777
        // Predicated region
        $region65: #{tpu_custom_call.1} parent=43 // pred_check
          %p779 = pneg %p171
        $region66: #{tpu_custom_call.1} parent=43 // pred_check_branch
          %781 = sbr.rel (%p779) target = $region68
        $region67: #{tpu_custom_call.1} parent=43 // pred_region
          %s782 = smul.u32 3, %s22
        $region68: #{tpu_custom_call.1} parent=43 // pred_fallthru
          _
      $region44: #{tpu_custom_call.1} parent=5 // pred_fallthru
        _
      %p783 = scmp.le.s32.totalorder 2, %s17
      // Predicated region
      $region69: #{tpu_custom_call.1} parent=5 // pred_check
        %p784 = pneg %p783
      $region70: #{tpu_custom_call.1} parent=5 // pred_check_branch
        %786 = sbr.rel (%p784) target = $region72
      $region71: #{tpu_custom_call.1} parent=5 // pred_region
        %s787 = ssub.s32 %s17, 2
        // Predicated region
        $region73: #{tpu_custom_call.1} parent=71 // pred_check
          %p788 = pneg %p177
        $region74: #{tpu_custom_call.1} parent=71 // pred_check_branch
          %790 = sbr.rel (%p788) target = $region76
        $region75: #{tpu_custom_call.1} parent=71 // pred_region
          %s791 = smul.u32 3, %s23
          %p792 = scmp.lt.s32.totalorder %s791, 5
          %s793 = scalar_select %p792, %s791, 5
          %s794 = smul.addr %s793, 8
          %s795 = scalar_lea.vmem %s6, %s794
        $region76: #{tpu_custom_call.1} parent=71 // pred_fallthru
          _
      $region72: #{tpu_custom_call.1} parent=5 // pred_fallthru
        _
    $region6: #{tpu_custom_call.1} parent=1 // loop_footer
      %s21 = sadd.s32 1, %s17
    $region7: #{tpu_custom_call.1} parent=1 // loop_footer_branch
      %16 = sbr.rel target = $region3
    $region8: #{tpu_custom_call.1} parent=1 // loop_exit
      _
    %796 = vsyncpa [#allocation3], 1
    %s797 = scalar_lea.sflag [#allocation3], 1
    %798 = vsyncpa %s797, 1
    %799 = vsyncpa [#allocation5], 1
    %800 = vsyncpa [#allocation8], 1

</llo_original>
